<compile_context>
chip_gen: v6e
topology: v6e:2x2x1
jax: 0.10.0
libtpu: 0.0.40
codegen_flags: <defaults>
</compile_context>

<pallas_src>
import jax
import jax.numpy as jnp
from jax.experimental import pallas as pl
from jax.experimental.pallas import tpu as pltpu

LEAKY = 0.2
BN_EPS = 1e-5


def _lrelu(x):
    return jnp.where(x >= 0, x, LEAKY * x)


# ----------------------------- Pallas kernels -----------------------------

def head_kernel(x_ref, wh_ref, bct_ref, wca1_ref, wca2_ref, kt_ref,
                o1_ref, xc_ref):
    """Fused fc+max (out1), conv_transform and CBAM for one batch element.

    x_ref:  (1, CF, HW)  backbone features, bf16, lane-dense spatial axis
    wh_ref: (N+C, CF)    stacked [w_fc; w_ct], bf16
    kt_ref: (2*HW, HW)   stacked Toeplitz [K_avg; K_max], bf16
    o1_ref: (1, 1, N)    classification scores s_m
    xc_ref: (1, C, HW)   CBAM output
    """
    n_cls = o1_ref.shape[-1]
    x = x_ref[0]                                                        # (CF, HW) bf16

    # --- single MXU pass for fc (no bias) + conv_transform against the shared x tile
    st = jnp.dot(wh_ref[...], x, preferred_element_type=jnp.float32)   # (N+C, HW) f32
    # out1 = forward_classification_sm: topk(1).mean == spatial max
    o1_ref[0] = jnp.max(st[:n_cls], axis=1)[None, :]                   # (1, N)
    t = st[n_cls:] + bct_ref[...]                                      # (C, HW)

    # --- channel attention (CBAM CA): MLP on [avg, max] columns (bias=False in torch)
    avg = jnp.mean(t, axis=1, keepdims=True)                           # (C, 1)
    mx = jnp.max(t, axis=1, keepdims=True)                             # (C, 1)
    am = jnp.concatenate([avg, mx], axis=1).astype(jnp.bfloat16)       # (C, 2)
    h = jnp.maximum(
        jnp.dot(wca1_ref[...], am, preferred_element_type=jnp.float32), 0.0)   # (Cr, 2)
    ca2 = jnp.dot(wca2_ref[...], h.astype(jnp.bfloat16),
                  preferred_element_type=jnp.float32)                  # (C, 2)
    ca = jax.nn.sigmoid(ca2[:, 0:1] + ca2[:, 1:2])                     # (C, 1)

    # channel-attended tensor, written into the output buffer (reused as scratch)
    xc_ref[0] = t * ca                                                 # (C, HW) f32

    # --- spatial attention (CBAM SA): 7x7 conv over [avg_map; max_map] as ONE matmul
    avg_map = jnp.mean(xc_ref[0], axis=0, keepdims=True)               # (1, HW)
    max_map = jnp.max(xc_ref[0], axis=0, keepdims=True)                # (1, HW)
    maps = jnp.concatenate([avg_map, max_map], axis=1).astype(jnp.bfloat16)  # (1, 2HW)
    pre = jnp.dot(maps, kt_ref[...], preferred_element_type=jnp.float32)     # (1, HW)
    xc_ref[0] = xc_ref[0] * jax.nn.sigmoid(pre)


def tail_kernel(v_ref, at_ref, ws_ref, bs_ref, wg_ref, bg_ref, bn_ref,
                wc1_ref, wc2_ref, bc_ref, wd_ref, bd_ref,
                maskT_ref, wlT_ref, beff_ref, o2_ref):
    """Fused D-GCN + residual + (last_linear * mask_mat).sum(-1) for one batch element.

    v_ref:  (1, C, N) f32
    o2_ref: (1, 1, N) f32
    """
    v = v_ref[0]                                                       # (C, N) f32

    # --- static GCN:  leaky(A @ v^T)^T == leaky(v @ A^T); at_ref holds A^T (bf16)
    s = _lrelu(jnp.dot(v.astype(jnp.bfloat16), at_ref[...],
                       preferred_element_type=jnp.float32))            # (C, N)
    s = _lrelu(jnp.dot(ws_ref[...], s.astype(jnp.bfloat16),
                       preferred_element_type=jnp.float32) + bs_ref[...])
    x1 = v + s
    x1_b = x1.astype(jnp.bfloat16)

    # --- construct dynamic adjacency
    xg = jnp.mean(x1, axis=1, keepdims=True)                           # (C, 1)
    xg = jnp.dot(wg_ref[...], xg.astype(jnp.bfloat16),
                 preferred_element_type=jnp.float32) + bg_ref[...]
    gamma = bn_ref[:, 0:1]
    beta = bn_ref[:, 1:2]
    rm = bn_ref[:, 2:3]
    rv = bn_ref[:, 3:4]
    xg = (xg - rm) * jax.lax.rsqrt(rv + BN_EPS) * gamma + beta         # eval-mode BN1d
    xg = _lrelu(xg)
    adj = jax.nn.sigmoid(
        jnp.dot(wc1_ref[...], xg.astype(jnp.bfloat16),
                preferred_element_type=jnp.float32)                    # (N,1) -> bcast cols
        + jnp.dot(wc2_ref[...], x1_b, preferred_element_type=jnp.float32)  # (N, N)
        + bc_ref[...])

    # --- dynamic GCN
    y = _lrelu(jnp.dot(x1_b, adj.astype(jnp.bfloat16),
                       preferred_element_type=jnp.float32))            # (C, N)
    y = _lrelu(jnp.dot(wd_ref[...], y.astype(jnp.bfloat16),
                       preferred_element_type=jnp.float32) + bd_ref[...])

    # --- residual + last_linear folded with mask_mat:
    # out2[m] = sum_c Wll[m,c] * (z @ mask^T)[c,m] + b_ll[m]*rowsum(mask)[m]
    z = v + y                                                          # (C, N)
    zm = jnp.dot(z, maskT_ref[...], preferred_element_type=jnp.float32)  # (C, N)
    o2_ref[0] = jnp.sum(wlT_ref[...] * zm, axis=0, keepdims=True) + beff_ref[...]


# ----------------------------- wrappers / glue -----------------------------

_CP = pltpu.CompilerParams(
    dimension_semantics=("parallel",),   # batch axis shards across TCs (v7x megacore)
    vmem_limit_bytes=48 * 1024 * 1024,   # above 16/32 MiB defaults, under v7x's 64 MiB
)


def _wspec(shape):
    """Constant-index weight block: fetched once, single-buffered."""
    return pl.BlockSpec(shape, lambda b: (0, 0), pipeline_mode=pl.Buffered(1))


def _sa_toeplitz(w_sa, H, W):
    """Stacked (2*HW, HW) Toeplitz matrix K so that the zero-padded 7x7 conv over the
    concatenated [avg_map; max_map] is: pre = [avg_row, max_row] @ K."""
    iy = jnp.arange(H)[:, None, None, None]
    ix = jnp.arange(W)[None, :, None, None]
    oy = jnp.arange(H)[None, None, :, None]
    ox = jnp.arange(W)[None, None, None, :]
    dy = iy - oy + 3
    dx = ix - ox + 3
    valid = (dy >= 0) & (dy < 7) & (dx >= 0) & (dx < 7)
    idx = jnp.clip(dy, 0, 6) * 7 + jnp.clip(dx, 0, 6)                  # (H, W, H, W)

    def one(ch):
        k = jnp.where(valid, w_sa[ch][idx], 0.0)
        return k.reshape(H * W, H * W)                                 # rows: input px, cols: output px

    return jnp.concatenate([one(0), one(1)], axis=0)                   # (2*HW, HW)


def prepare_params(p, H, W):
    """Per-weight-set precompute, hoisted out of the jitted forward:
    bf16 casts for all MXU operands, fc/conv_transform stacking, Toeplitz build,
    last_linear transpose and bias folding with the mask row-sums."""
    bf = jnp.bfloat16
    f32 = jnp.float32
    N = p["w_fc"].shape[0]
    return {
        # --- head ---
        "wh": jnp.concatenate([p["w_fc"], p["w_ct"]], axis=0).astype(bf),   # (N+C, CF)
        "b_ct": p["b_ct"].astype(f32),
        "w_ca1": p["w_ca1"].astype(bf),
        "w_ca2": p["w_ca2"].astype(bf),
        "kt": _sa_toeplitz(p["w_sa"], H, W).astype(bf),                     # (2HW, HW)
        # --- tail ---
        "adj_T": p["w_adj"].T.astype(bf),
        "w_sw": p["w_sw"].astype(bf),
        "b_sw": p["b_sw"].astype(f32),
        "w_g": p["w_g"].astype(bf),
        "b_g": p["b_g"].astype(f32),
        "bn": p["bn"].astype(f32),
        "w_cm1": p["w_cm1"].astype(bf),
        "w_cm2": p["w_cm2"].astype(bf),
        "b_cm": p["b_cm"].astype(f32),
        "w_dw": p["w_dw"].astype(bf),
        "b_dw": p["b_dw"].astype(f32),
        "mask_T": p["mask"].T.astype(f32),                                  # (N, N)
        "w_llT": p["w_ll"].T.astype(f32),                                   # (C, N)
        "b_eff": (p["b_ll"].reshape(-1) * p["mask"].sum(axis=1)).reshape(1, N).astype(f32),
    }


def forward(x_feat, pp):
    """x_feat: (B, CF, H, W) backbone features. Returns (out1, out2), each (B, N)."""
    B, CF, H, W = x_feat.shape
    HW = H * W
    N = pp["mask_T"].shape[0]
    C = pp["w_llT"].shape[0]
    Cr = pp["w_ca1"].shape[0]

    # bf16 MXU operand; also halves the HBM->VMEM DMA of the feature map
    xf = x_feat.reshape(B, CF, HW).astype(jnp.bfloat16)

    # --- fused head: out1 + conv_transform + CBAM ---
    out1, xc = pl.pallas_call(
        head_kernel,
        out_shape=(jax.ShapeDtypeStruct((B, 1, N), jnp.float32),
                   jax.ShapeDtypeStruct((B, C, HW), jnp.float32)),
        grid=(B,),
        in_specs=[
            pl.BlockSpec((1, CF, HW), lambda b: (b, 0, 0)),
            _wspec((N + C, CF)),
            _wspec((C, 1)),
            _wspec((Cr, C)),
            _wspec((C, Cr)),
            _wspec((2 * HW, HW)),
        ],
        out_specs=(pl.BlockSpec((1, 1, N), lambda b: (b, 0, 0)),
                   pl.BlockSpec((1, C, HW), lambda b: (b, 0, 0))),
        compiler_params=_CP,
    )(xf, pp["wh"], pp["b_ct"], pp["w_ca1"], pp["w_ca2"], pp["kt"])
    out1 = out1[:, 0, :]                                               # (B, N)

    # topk over flattened spatial axis (sorted descending, matches torch.topk values)
    v = jax.lax.top_k(xc, N)[0]                                        # (B, C, N) f32

    # --- fused tail: D-GCN + residual + last_linear*mask ---
    out2 = pl.pallas_call(
        tail_kernel,
        out_shape=jax.ShapeDtypeStruct((B, 1, N), jnp.float32),
        grid=(B,),
        in_specs=[
            pl.BlockSpec((1, C, N), lambda b: (b, 0, 0)),
            _wspec((N, N)),    # static_adj weight^T
            _wspec((C, C)),    # static_weight
            _wspec((C, 1)),
            _wspec((C, C)),    # conv_global
            _wspec((C, 1)),
            _wspec((C, 4)),    # bn_global (gamma, beta, mean, var)
            _wspec((N, C)),    # conv_create_co_mat, global half
            _wspec((N, C)),    # conv_create_co_mat, local half
            _wspec((N, 1)),
            _wspec((C, C)),    # dynamic_weight
            _wspec((C, 1)),
            _wspec((N, N)),    # mask_mat^T
            _wspec((C, N)),    # last_linear weight^T
            _wspec((1, N)),    # last_linear bias * mask row-sums
        ],
        out_specs=pl.BlockSpec((1, 1, N), lambda b: (b, 0, 0)),
        compiler_params=_CP,
    )(v, pp["adj_T"], pp["w_sw"], pp["b_sw"], pp["w_g"], pp["b_g"], pp["bn"],
      pp["w_cm1"], pp["w_cm2"], pp["b_cm"], pp["w_dw"], pp["b_dw"],
      pp["mask_T"], pp["w_llT"], pp["b_eff"])

    return out1, out2[:, 0, :]


def init_params(key, CF=64, C=32, N=8, ratio=16):
    Cr = max(C // ratio, 1)
    ks = jax.random.split(key, 20)

    def rnd(k, shape, scale=0.1):
        return scale * jax.random.normal(k, shape, jnp.float32)

    bn = jnp.stack([
        jnp.ones((C,), jnp.float32),                                   # gamma
        jnp.zeros((C,), jnp.float32),                                  # beta
        0.1 * jax.random.normal(ks[11], (C,), jnp.float32),            # running_mean
        0.5 + 0.1 * jnp.abs(jax.random.normal(ks[12], (C,), jnp.float32)),  # running_var
    ], axis=1)                                                         # (C, 4)

    return {
        "w_fc": rnd(ks[0], (N, CF)),                  # fc: Conv2d(CF, N, 1, bias=False)
        "w_ct": rnd(ks[1], (C, CF)),                  # conv_transform weight
        "b_ct": rnd(ks[2], (C, 1)),                   # conv_transform bias
        "w_ca1": rnd(ks[3], (Cr, C)),                 # ChannelAttention fc[0] (bias=False)
        "w_ca2": rnd(ks[4], (C, Cr)),                 # ChannelAttention fc[2] (bias=False)
        "w_sa": rnd(ks[5], (1, 2, 7, 7)).reshape(2, 49),   # SpatialAttention taps (bias=False)
        "w_adj": rnd(ks[6], (N, N)),                  # static_adj weight
        "w_sw": rnd(ks[7], (C, C)),                   # static_weight
        "b_sw": rnd(ks[8], (C, 1)),
        "w_g": rnd(ks[9], (C, C)),                    # conv_global
        "b_g": rnd(ks[10], (C, 1)),
        "bn": bn,                                     # bn_global (eval-mode stats)
        "w_cm1": rnd(ks[13], (N, C)),                 # conv_create_co_mat, global half
        "w_cm2": rnd(ks[14], (N, C)),                 # conv_create_co_mat, local half
        "b_cm": rnd(ks[15], (N, 1)),
        "w_dw": rnd(ks[16], (C, C)),                  # dynamic_weight
        "b_dw": rnd(ks[17], (C, 1)),
        "w_ll": rnd(ks[18], (N, C)),                  # last_linear weight
        "b_ll": rnd(ks[19], (N,)),                    # last_linear bias
        "mask": jnp.eye(N, dtype=jnp.float32),        # mask_mat (eye at init, as in torch)
    }


if __name__ == "__main__":
    key = jax.random.PRNGKey(0)
    kp, kx = jax.random.split(key)
    B, CF, C, N, H, W = 2, 64, 32, 8, 8, 8
    params = init_params(kp, CF=CF, C=C, N=N, ratio=16)
    pp = prepare_params(params, H, W)                 # hoisted precompute (once per weights)
    x_feat = jax.random.normal(kx, (B, CF, H, W), jnp.float32)

    out1, out2 = jax.jit(forward)(x_feat, pp)
    jax.block_until_ready((out1, out2))
    assert out1.shape == (B, N) and out2.shape == (B, N)
    assert bool(jnp.all(jnp.isfinite(out1))) and bool(jnp.all(jnp.isfinite(out2)))
    print("KERNEL_OK")
</pallas_src>

<mosaic_0001>
module attributes {stable_mosaic.version = 11 : i64} {
  func.func @tail_kernel(%arg0: i32, %arg1: memref<1x32x8xf32, #tpu.memory_space<vmem>>, %arg2: memref<8x8xbf16, #tpu.memory_space<vmem>>, %arg3: memref<32x32xbf16, #tpu.memory_space<vmem>>, %arg4: memref<32x1xf32, #tpu.memory_space<vmem>>, %arg5: memref<32x32xbf16, #tpu.memory_space<vmem>>, %arg6: memref<32x1xf32, #tpu.memory_space<vmem>>, %arg7: memref<32x4xf32, #tpu.memory_space<vmem>>, %arg8: memref<8x32xbf16, #tpu.memory_space<vmem>>, %arg9: memref<8x32xbf16, #tpu.memory_space<vmem>>, %arg10: memref<8x1xf32, #tpu.memory_space<vmem>>, %arg11: memref<32x32xbf16, #tpu.memory_space<vmem>>, %arg12: memref<32x1xf32, #tpu.memory_space<vmem>>, %arg13: memref<8x8xf32, #tpu.memory_space<vmem>>, %arg14: memref<32x8xf32, #tpu.memory_space<vmem>>, %arg15: memref<1x8xf32, #tpu.memory_space<vmem>>, %arg16: memref<1x1x8xf32, #tpu.memory_space<vmem>>) attributes {dimension_semantics = [#tpu.dimension_semantics<parallel>], iteration_bounds = array<i64: 2>, scalar_prefetch = 0 : i64, scratch_operands = 0 : i64, tpu.core_type = #tpu.core_type<tc>, window_params = [{transform_indices = @transform_0, window_bounds = array<i64: 1, 32, 8>}, {pipeline_mode = #tpu.pipeline_mode<synchronous>, transform_indices = @transform_1, window_bounds = array<i64: 8, 8>}, {pipeline_mode = #tpu.pipeline_mode<synchronous>, transform_indices = @transform_2, window_bounds = array<i64: 32, 32>}, {pipeline_mode = #tpu.pipeline_mode<synchronous>, transform_indices = @transform_3, window_bounds = array<i64: 32, 1>}, {pipeline_mode = #tpu.pipeline_mode<synchronous>, transform_indices = @transform_4, window_bounds = array<i64: 32, 32>}, {pipeline_mode = #tpu.pipeline_mode<synchronous>, transform_indices = @transform_5, window_bounds = array<i64: 32, 1>}, {pipeline_mode = #tpu.pipeline_mode<synchronous>, transform_indices = @transform_6, window_bounds = array<i64: 32, 4>}, {pipeline_mode = #tpu.pipeline_mode<synchronous>, transform_indices = @transform_7, window_bounds = array<i64: 8, 32>}, {pipeline_mode = #tpu.pipeline_mode<synchronous>, transform_indices = @transform_8, window_bounds = array<i64: 8, 32>}, {pipeline_mode = #tpu.pipeline_mode<synchronous>, transform_indices = @transform_9, window_bounds = array<i64: 8, 1>}, {pipeline_mode = #tpu.pipeline_mode<synchronous>, transform_indices = @transform_10, window_bounds = array<i64: 32, 32>}, {pipeline_mode = #tpu.pipeline_mode<synchronous>, transform_indices = @transform_11, window_bounds = array<i64: 32, 1>}, {pipeline_mode = #tpu.pipeline_mode<synchronous>, transform_indices = @transform_12, window_bounds = array<i64: 8, 8>}, {pipeline_mode = #tpu.pipeline_mode<synchronous>, transform_indices = @transform_13, window_bounds = array<i64: 32, 8>}, {pipeline_mode = #tpu.pipeline_mode<synchronous>, transform_indices = @transform_14, window_bounds = array<i64: 1, 8>}, {transform_indices = @transform_15, window_bounds = array<i64: 1, 1, 8>}]} {
    %c0 = arith.constant 0 : index
    %c0_0 = arith.constant 0 : index
    %c0_1 = arith.constant 0 : index
    %0 = vector.load %arg1[%c0, %c0_0, %c0_1] : memref<1x32x8xf32, #tpu.memory_space<vmem>>, vector<1x32x8xf32>
    %1 = vector.shape_cast %0 : vector<1x32x8xf32> to vector<32x8xf32>
    %2 = arith.truncf %1 : vector<32x8xf32> to vector<32x8xbf16>
    %c0_2 = arith.constant 0 : index
    %c0_3 = arith.constant 0 : index
    %3 = vector.load %arg2[%c0_2, %c0_3] : memref<8x8xbf16, #tpu.memory_space<vmem>>, vector<8x8xbf16>
    %cst = arith.constant dense<0.000000e+00> : vector<32x8xf32>
    %4 = tpu.matmul %2, %3, %cst {dimension_numbers = #tpu.dot_dimension_numbers<[1], [0], [0], [1], [0, 0, 1, 1], [], []>} : vector<32x8xbf16>, vector<8x8xbf16>, vector<32x8xf32> -> vector<32x8xf32>
    %cst_4 = arith.constant 0.000000e+00 : f32
    %5 = vector.broadcast %cst_4 : f32 to vector<32x8xf32>
    %6 = arith.cmpf oge, %4, %5 : vector<32x8xf32>
    %cst_5 = arith.constant 2.000000e-01 : f32
    %7 = vector.broadcast %cst_5 : f32 to vector<32x8xf32>
    %8 = arith.mulf %7, %4 : vector<32x8xf32>
    %9 = arith.select %6, %4, %8 : vector<32x8xi1>, vector<32x8xf32>
    %c0_6 = arith.constant 0 : index
    %c0_7 = arith.constant 0 : index
    %10 = vector.load %arg3[%c0_6, %c0_7] : memref<32x32xbf16, #tpu.memory_space<vmem>>, vector<32x32xbf16>
    %11 = arith.truncf %9 : vector<32x8xf32> to vector<32x8xbf16>
    %cst_8 = arith.constant dense<0.000000e+00> : vector<32x8xf32>
    %12 = tpu.matmul %10, %11, %cst_8 {dimension_numbers = #tpu.dot_dimension_numbers<[1], [0], [0], [1], [0, 0, 1, 1], [], []>} : vector<32x32xbf16>, vector<32x8xbf16>, vector<32x8xf32> -> vector<32x8xf32>
    %c0_9 = arith.constant 0 : index
    %c0_10 = arith.constant 0 : index
    %13 = vector.load %arg4[%c0_9, %c0_10] : memref<32x1xf32, #tpu.memory_space<vmem>>, vector<32x1xf32>
    %14 = vector.broadcast %13 : vector<32x1xf32> to vector<32x8xf32>
    %15 = arith.addf %12, %14 : vector<32x8xf32>
    %cst_11 = arith.constant 0.000000e+00 : f32
    %16 = vector.broadcast %cst_11 : f32 to vector<32x8xf32>
    %17 = arith.cmpf oge, %15, %16 : vector<32x8xf32>
    %cst_12 = arith.constant 2.000000e-01 : f32
    %18 = vector.broadcast %cst_12 : f32 to vector<32x8xf32>
    %19 = arith.mulf %18, %15 : vector<32x8xf32>
    %20 = arith.select %17, %15, %19 : vector<32x8xi1>, vector<32x8xf32>
    %21 = arith.addf %1, %20 : vector<32x8xf32>
    %22 = arith.truncf %21 : vector<32x8xf32> to vector<32x8xbf16>
    %cst_13 = arith.constant dense<0.000000e+00> : vector<32xf32>
    %23 = vector.multi_reduction <add>, %21, %cst_13 [1] : vector<32x8xf32> to vector<32xf32>
    %24 = vector.shape_cast %23 : vector<32xf32> to vector<32x1xf32>
    %cst_14 = arith.constant 8.000000e+00 : f32
    %25 = vector.broadcast %cst_14 : f32 to vector<32x1xf32>
    %26 = arith.divf %24, %25 : vector<32x1xf32>
    %c0_15 = arith.constant 0 : index
    %c0_16 = arith.constant 0 : index
    %27 = vector.load %arg5[%c0_15, %c0_16] : memref<32x32xbf16, #tpu.memory_space<vmem>>, vector<32x32xbf16>
    %28 = arith.truncf %26 : vector<32x1xf32> to vector<32x1xbf16>
    %cst_17 = arith.constant dense<0.000000e+00> : vector<32x1xf32>
    %29 = tpu.matmul %27, %28, %cst_17 {dimension_numbers = #tpu.dot_dimension_numbers<[1], [0], [0], [1], [0, 0, 1, 1], [], []>} : vector<32x32xbf16>, vector<32x1xbf16>, vector<32x1xf32> -> vector<32x1xf32>
    %c0_18 = arith.constant 0 : index
    %c0_19 = arith.constant 0 : index
    %30 = vector.load %arg6[%c0_18, %c0_19] : memref<32x1xf32, #tpu.memory_space<vmem>>, vector<32x1xf32>
    %31 = arith.addf %29, %30 : vector<32x1xf32>
    %c0_20 = arith.constant 0 : index
    %c0_21 = arith.constant 0 : index
    %32 = vector.load %arg7[%c0_20, %c0_21] : memref<32x4xf32, #tpu.memory_space<vmem>>, vector<32x1xf32>
    %c0_22 = arith.constant 0 : index
    %c1 = arith.constant 1 : index
    %33 = vector.load %arg7[%c0_22, %c1] : memref<32x4xf32, #tpu.memory_space<vmem>>, vector<32x1xf32>
    %c0_23 = arith.constant 0 : index
    %c2 = arith.constant 2 : index
    %34 = vector.load %arg7[%c0_23, %c2] : memref<32x4xf32, #tpu.memory_space<vmem>>, vector<32x1xf32>
    %c0_24 = arith.constant 0 : index
    %c3 = arith.constant 3 : index
    %35 = vector.load %arg7[%c0_24, %c3] : memref<32x4xf32, #tpu.memory_space<vmem>>, vector<32x1xf32>
    %36 = arith.subf %31, %34 : vector<32x1xf32>
    %cst_25 = arith.constant 9.99999974E-6 : f32
    %37 = vector.broadcast %cst_25 : f32 to vector<32x1xf32>
    %38 = arith.addf %35, %37 : vector<32x1xf32>
    %39 = math.rsqrt %38 : vector<32x1xf32>
    %40 = arith.mulf %36, %39 : vector<32x1xf32>
    %41 = arith.mulf %40, %32 : vector<32x1xf32>
    %42 = arith.addf %41, %33 : vector<32x1xf32>
    %cst_26 = arith.constant 0.000000e+00 : f32
    %43 = vector.broadcast %cst_26 : f32 to vector<32x1xf32>
    %44 = arith.cmpf oge, %42, %43 : vector<32x1xf32>
    %cst_27 = arith.constant 2.000000e-01 : f32
    %45 = vector.broadcast %cst_27 : f32 to vector<32x1xf32>
    %46 = arith.mulf %45, %42 : vector<32x1xf32>
    %47 = arith.select %44, %42, %46 : vector<32x1xi1>, vector<32x1xf32>
    %c0_28 = arith.constant 0 : index
    %c0_29 = arith.constant 0 : index
    %48 = vector.load %arg8[%c0_28, %c0_29] : memref<8x32xbf16, #tpu.memory_space<vmem>>, vector<8x32xbf16>
    %49 = arith.truncf %47 : vector<32x1xf32> to vector<32x1xbf16>
    %cst_30 = arith.constant dense<0.000000e+00> : vector<8x1xf32>
    %50 = tpu.matmul %48, %49, %cst_30 {dimension_numbers = #tpu.dot_dimension_numbers<[1], [0], [0], [1], [0, 0, 1, 1], [], []>} : vector<8x32xbf16>, vector<32x1xbf16>, vector<8x1xf32> -> vector<8x1xf32>
    %c0_31 = arith.constant 0 : index
    %c0_32 = arith.constant 0 : index
    %51 = vector.load %arg9[%c0_31, %c0_32] : memref<8x32xbf16, #tpu.memory_space<vmem>>, vector<8x32xbf16>
    %cst_33 = arith.constant dense<0.000000e+00> : vector<8x8xf32>
    %52 = tpu.matmul %51, %22, %cst_33 {dimension_numbers = #tpu.dot_dimension_numbers<[1], [0], [0], [1], [0, 0, 1, 1], [], []>} : vector<8x32xbf16>, vector<32x8xbf16>, vector<8x8xf32> -> vector<8x8xf32>
    %53 = vector.broadcast %50 : vector<8x1xf32> to vector<8x8xf32>
    %54 = arith.addf %53, %52 : vector<8x8xf32>
    %c0_34 = arith.constant 0 : index
    %c0_35 = arith.constant 0 : index
    %55 = vector.load %arg10[%c0_34, %c0_35] : memref<8x1xf32, #tpu.memory_space<vmem>>, vector<8x1xf32>
    %56 = vector.broadcast %55 : vector<8x1xf32> to vector<8x8xf32>
    %57 = arith.addf %54, %56 : vector<8x8xf32>
    %58 = arith.negf %57 : vector<8x8xf32>
    %59 = math.exp %58 : vector<8x8xf32>
    %cst_36 = arith.constant 1.000000e+00 : f32
    %60 = vector.broadcast %cst_36 : f32 to vector<8x8xf32>
    %61 = arith.addf %60, %59 : vector<8x8xf32>
    %62 = arith.divf %60, %61 : vector<8x8xf32>
    %63 = arith.truncf %62 : vector<8x8xf32> to vector<8x8xbf16>
    %cst_37 = arith.constant dense<0.000000e+00> : vector<32x8xf32>
    %64 = tpu.matmul %22, %63, %cst_37 {dimension_numbers = #tpu.dot_dimension_numbers<[1], [0], [0], [1], [0, 0, 1, 1], [], []>} : vector<32x8xbf16>, vector<8x8xbf16>, vector<32x8xf32> -> vector<32x8xf32>
    %cst_38 = arith.constant 0.000000e+00 : f32
    %65 = vector.broadcast %cst_38 : f32 to vector<32x8xf32>
    %66 = arith.cmpf oge, %64, %65 : vector<32x8xf32>
    %cst_39 = arith.constant 2.000000e-01 : f32
    %67 = vector.broadcast %cst_39 : f32 to vector<32x8xf32>
    %68 = arith.mulf %67, %64 : vector<32x8xf32>
    %69 = arith.select %66, %64, %68 : vector<32x8xi1>, vector<32x8xf32>
    %c0_40 = arith.constant 0 : index
    %c0_41 = arith.constant 0 : index
    %70 = vector.load %arg11[%c0_40, %c0_41] : memref<32x32xbf16, #tpu.memory_space<vmem>>, vector<32x32xbf16>
    %71 = arith.truncf %69 : vector<32x8xf32> to vector<32x8xbf16>
    %cst_42 = arith.constant dense<0.000000e+00> : vector<32x8xf32>
    %72 = tpu.matmul %70, %71, %cst_42 {dimension_numbers = #tpu.dot_dimension_numbers<[1], [0], [0], [1], [0, 0, 1, 1], [], []>} : vector<32x32xbf16>, vector<32x8xbf16>, vector<32x8xf32> -> vector<32x8xf32>
    %c0_43 = arith.constant 0 : index
    %c0_44 = arith.constant 0 : index
    %73 = vector.load %arg12[%c0_43, %c0_44] : memref<32x1xf32, #tpu.memory_space<vmem>>, vector<32x1xf32>
    %74 = vector.broadcast %73 : vector<32x1xf32> to vector<32x8xf32>
    %75 = arith.addf %72, %74 : vector<32x8xf32>
    %cst_45 = arith.constant 0.000000e+00 : f32
    %76 = vector.broadcast %cst_45 : f32 to vector<32x8xf32>
    %77 = arith.cmpf oge, %75, %76 : vector<32x8xf32>
    %cst_46 = arith.constant 2.000000e-01 : f32
    %78 = vector.broadcast %cst_46 : f32 to vector<32x8xf32>
    %79 = arith.mulf %78, %75 : vector<32x8xf32>
    %80 = arith.select %77, %75, %79 : vector<32x8xi1>, vector<32x8xf32>
    %81 = arith.addf %1, %80 : vector<32x8xf32>
    %c0_47 = arith.constant 0 : index
    %c0_48 = arith.constant 0 : index
    %82 = vector.load %arg13[%c0_47, %c0_48] : memref<8x8xf32, #tpu.memory_space<vmem>>, vector<8x8xf32>
    %cst_49 = arith.constant dense<0.000000e+00> : vector<32x8xf32>
    %83 = tpu.matmul %81, %82, %cst_49 {dimension_numbers = #tpu.dot_dimension_numbers<[1], [0], [0], [1], [0, 0, 1, 1], [], []>} : vector<32x8xf32>, vector<8x8xf32>, vector<32x8xf32> -> vector<32x8xf32>
    %c0_50 = arith.constant 0 : index
    %c0_51 = arith.constant 0 : index
    %84 = vector.load %arg14[%c0_50, %c0_51] : memref<32x8xf32, #tpu.memory_space<vmem>>, vector<32x8xf32>
    %85 = arith.mulf %84, %83 : vector<32x8xf32>
    %cst_52 = arith.constant dense<0.000000e+00> : vector<8xf32>
    %86 = vector.multi_reduction <add>, %85, %cst_52 [0] : vector<32x8xf32> to vector<8xf32>
    %87 = vector.shape_cast %86 : vector<8xf32> to vector<1x8xf32>
    %c0_53 = arith.constant 0 : index
    %c0_54 = arith.constant 0 : index
    %88 = vector.load %arg15[%c0_53, %c0_54] : memref<1x8xf32, #tpu.memory_space<vmem>>, vector<1x8xf32>
    %89 = arith.addf %87, %88 : vector<1x8xf32>
    %c0_55 = arith.constant 0 : index
    %c0_56 = arith.constant 0 : index
    %c0_57 = arith.constant 0 : index
    %90 = vector.load %arg16[%c0_55, %c0_56, %c0_57] : memref<1x1x8xf32, #tpu.memory_space<vmem>>, vector<1x1x8xf32>
    %91 = vector.shape_cast %90 : vector<1x1x8xf32> to vector<1x8xf32>
    %92 = vector.shape_cast %89 : vector<1x8xf32> to vector<1x1x8xf32>
    tpu.vector_store %arg16[%c0_55, %c0_56, %c0_57], %92 {strides = array<i32>} : memref<1x1x8xf32, #tpu.memory_space<vmem>>, vector<1x1x8xf32>,
    return
  }
  func.func @transform_0(%arg0: i32) -> (i32, i32, i32) {
    %c0_i32 = arith.constant 0 : i32
    %c0_i32_0 = arith.constant 0 : i32
    %c0_i32_1 = arith.constant 0 : i32
    return %arg0, %c0_i32, %c0_i32_0 : i32, i32, i32
  }
  func.func @transform_1(%arg0: i32) -> (i32, i32) {
    %c0_i32 = arith.constant 0 : i32
    %c0_i32_0 = arith.constant 0 : i32
    %c0_i32_1 = arith.constant 0 : i32
    return %c0_i32, %c0_i32_0 : i32, i32
  }
  func.func @transform_2(%arg0: i32) -> (i32, i32) {
    %c0_i32 = arith.constant 0 : i32
    %c0_i32_0 = arith.constant 0 : i32
    %c0_i32_1 = arith.constant 0 : i32
    return %c0_i32, %c0_i32_0 : i32, i32
  }
  func.func @transform_3(%arg0: i32) -> (i32, i32) {
    %c0_i32 = arith.constant 0 : i32
    %c0_i32_0 = arith.constant 0 : i32
    %c0_i32_1 = arith.constant 0 : i32
    return %c0_i32, %c0_i32_0 : i32, i32
  }
  func.func @transform_4(%arg0: i32) -> (i32, i32) {
    %c0_i32 = arith.constant 0 : i32
    %c0_i32_0 = arith.constant 0 : i32
    %c0_i32_1 = arith.constant 0 : i32
    return %c0_i32, %c0_i32_0 : i32, i32
  }
  func.func @transform_5(%arg0: i32) -> (i32, i32) {
    %c0_i32 = arith.constant 0 : i32
    %c0_i32_0 = arith.constant 0 : i32
    %c0_i32_1 = arith.constant 0 : i32
    return %c0_i32, %c0_i32_0 : i32, i32
  }
  func.func @transform_6(%arg0: i32) -> (i32, i32) {
    %c0_i32 = arith.constant 0 : i32
    %c0_i32_0 = arith.constant 0 : i32
    %c0_i32_1 = arith.constant 0 : i32
    return %c0_i32, %c0_i32_0 : i32, i32
  }
  func.func @transform_7(%arg0: i32) -> (i32, i32) {
    %c0_i32 = arith.constant 0 : i32
    %c0_i32_0 = arith.constant 0 : i32
    %c0_i32_1 = arith.constant 0 : i32
    return %c0_i32, %c0_i32_0 : i32, i32
  }
  func.func @transform_8(%arg0: i32) -> (i32, i32) {
    %c0_i32 = arith.constant 0 : i32
    %c0_i32_0 = arith.constant 0 : i32
    %c0_i32_1 = arith.constant 0 : i32
    return %c0_i32, %c0_i32_0 : i32, i32
  }
  func.func @transform_9(%arg0: i32) -> (i32, i32) {
    %c0_i32 = arith.constant 0 : i32
    %c0_i32_0 = arith.constant 0 : i32
    %c0_i32_1 = arith.constant 0 : i32
    return %c0_i32, %c0_i32_0 : i32, i32
  }
  func.func @transform_10(%arg0: i32) -> (i32, i32) {
    %c0_i32 = arith.constant 0 : i32
    %c0_i32_0 = arith.constant 0 : i32
    %c0_i32_1 = arith.constant 0 : i32
    return %c0_i32, %c0_i32_0 : i32, i32
  }
  func.func @transform_11(%arg0: i32) -> (i32, i32) {
    %c0_i32 = arith.constant 0 : i32
    %c0_i32_0 = arith.constant 0 : i32
    %c0_i32_1 = arith.constant 0 : i32
    return %c0_i32, %c0_i32_0 : i32, i32
  }
  func.func @transform_12(%arg0: i32) -> (i32, i32) {
    %c0_i32 = arith.constant 0 : i32
    %c0_i32_0 = arith.constant 0 : i32
    %c0_i32_1 = arith.constant 0 : i32
    return %c0_i32, %c0_i32_0 : i32, i32
  }
  func.func @transform_13(%arg0: i32) -> (i32, i32) {
    %c0_i32 = arith.constant 0 : i32
    %c0_i32_0 = arith.constant 0 : i32
    %c0_i32_1 = arith.constant 0 : i32
    return %c0_i32, %c0_i32_0 : i32, i32
  }
  func.func @transform_14(%arg0: i32) -> (i32, i32) {
    %c0_i32 = arith.constant 0 : i32
    %c0_i32_0 = arith.constant 0 : i32
    %c0_i32_1 = arith.constant 0 : i32
    return %c0_i32, %c0_i32_0 : i32, i32
  }
  func.func @transform_15(%arg0: i32) -> (i32, i32, i32) {
    %c0_i32 = arith.constant 0 : i32
    %c0_i32_0 = arith.constant 0 : i32
    %c0_i32_1 = arith.constant 0 : i32
    return %arg0, %c0_i32, %c0_i32_0 : i32, i32, i32
  }
}

module attributes {stable_mosaic.version = 11 : i64} {
  func.func @head_kernel(%arg0: i32, %arg1: memref<1x64x64xbf16, #tpu.memory_space<vmem>>, %arg2: memref<40x64xbf16, #tpu.memory_space<vmem>>, %arg3: memref<32x1xf32, #tpu.memory_space<vmem>>, %arg4: memref<2x32xbf16, #tpu.memory_space<vmem>>, %arg5: memref<32x2xbf16, #tpu.memory_space<vmem>>, %arg6: memref<128x64xbf16, #tpu.memory_space<vmem>>, %arg7: memref<1x1x8xf32, #tpu.memory_space<vmem>>, %arg8: memref<1x32x64xf32, #tpu.memory_space<vmem>>) attributes {dimension_semantics = [#tpu.dimension_semantics<parallel>], iteration_bounds = array<i64: 2>, scalar_prefetch = 0 : i64, scratch_operands = 0 : i64, tpu.core_type = #tpu.core_type<tc>, window_params = [{transform_indices = @transform_0, window_bounds = array<i64: 1, 64, 64>}, {pipeline_mode = #tpu.pipeline_mode<synchronous>, transform_indices = @transform_1, window_bounds = array<i64: 40, 64>}, {pipeline_mode = #tpu.pipeline_mode<synchronous>, transform_indices = @transform_2, window_bounds = array<i64: 32, 1>}, {pipeline_mode = #tpu.pipeline_mode<synchronous>, transform_indices = @transform_3, window_bounds = array<i64: 2, 32>}, {pipeline_mode = #tpu.pipeline_mode<synchronous>, transform_indices = @transform_4, window_bounds = array<i64: 32, 2>}, {pipeline_mode = #tpu.pipeline_mode<synchronous>, transform_indices = @transform_5, window_bounds = array<i64: 128, 64>}, {transform_indices = @transform_6, window_bounds = array<i64: 1, 1, 8>}, {transform_indices = @transform_7, window_bounds = array<i64: 1, 32, 64>}]} {
    %c0 = arith.constant 0 : index
    %c0_0 = arith.constant 0 : index
    %c0_1 = arith.constant 0 : index
    %0 = vector.load %arg1[%c0, %c0_0, %c0_1] : memref<1x64x64xbf16, #tpu.memory_space<vmem>>, vector<1x64x64xbf16>
    %1 = vector.shape_cast %0 : vector<1x64x64xbf16> to vector<64x64xbf16>
    %c0_2 = arith.constant 0 : index
    %c0_3 = arith.constant 0 : index
    %2 = vector.load %arg2[%c0_2, %c0_3] : memref<40x64xbf16, #tpu.memory_space<vmem>>, vector<40x64xbf16>
    %cst = arith.constant dense<0.000000e+00> : vector<40x64xf32>
    %3 = tpu.matmul %2, %1, %cst {dimension_numbers = #tpu.dot_dimension_numbers<[1], [0], [0], [1], [0, 0, 1, 1], [], []>} : vector<40x64xbf16>, vector<64x64xbf16>, vector<40x64xf32> -> vector<40x64xf32>
    %4 = vector.extract_strided_slice %3 {offsets = [0, 0], sizes = [8, 64], strides = [1, 1]} : vector<40x64xf32> to vector<8x64xf32>
    %cst_4 = arith.constant dense<0xFF800000> : vector<8xf32>
    %5 = vector.multi_reduction <maximumf>, %4, %cst_4 [1] : vector<8x64xf32> to vector<8xf32>
    %6 = vector.shape_cast %5 : vector<8xf32> to vector<1x8xf32>
    %c0_5 = arith.constant 0 : index
    %c0_6 = arith.constant 0 : index
    %c0_7 = arith.constant 0 : index
    %7 = vector.load %arg7[%c0_5, %c0_6, %c0_7] : memref<1x1x8xf32, #tpu.memory_space<vmem>>, vector<1x1x8xf32>
    %8 = vector.shape_cast %7 : vector<1x1x8xf32> to vector<1x8xf32>
    %9 = vector.shape_cast %6 : vector<1x8xf32> to vector<1x1x8xf32>
    tpu.vector_store %arg7[%c0_5, %c0_6, %c0_7], %9 {strides = array<i32>} : memref<1x1x8xf32, #tpu.memory_space<vmem>>, vector<1x1x8xf32>,
    %10 = vector.extract_strided_slice %3 {offsets = [8, 0], sizes = [32, 64], strides = [1, 1]} : vector<40x64xf32> to vector<32x64xf32>
    %c0_8 = arith.constant 0 : index
    %c0_9 = arith.constant 0 : index
    %11 = vector.load %arg3[%c0_8, %c0_9] : memref<32x1xf32, #tpu.memory_space<vmem>>, vector<32x1xf32>
    %12 = vector.broadcast %11 : vector<32x1xf32> to vector<32x64xf32>
    %13 = arith.addf %10, %12 : vector<32x64xf32>
    %cst_10 = arith.constant dense<0.000000e+00> : vector<32xf32>
    %14 = vector.multi_reduction <add>, %13, %cst_10 [1] : vector<32x64xf32> to vector<32xf32>
    %15 = vector.shape_cast %14 : vector<32xf32> to vector<32x1xf32>
    %cst_11 = arith.constant 6.400000e+01 : f32
    %16 = vector.broadcast %cst_11 : f32 to vector<32x1xf32>
    %17 = arith.divf %15, %16 : vector<32x1xf32>
    %cst_12 = arith.constant dense<0xFF800000> : vector<32xf32>
    %18 = vector.multi_reduction <maximumf>, %13, %cst_12 [1] : vector<32x64xf32> to vector<32xf32>
    %19 = vector.shape_cast %18 : vector<32xf32> to vector<32x1xf32>
    %20 = tpu.concatenate %17, %19 in 1 : vector<32x1xf32>, vector<32x1xf32> -> vector<32x2xf32>
    %21 = arith.truncf %20 : vector<32x2xf32> to vector<32x2xbf16>
    %c0_13 = arith.constant 0 : index
    %c0_14 = arith.constant 0 : index
    %22 = vector.load %arg4[%c0_13, %c0_14] : memref<2x32xbf16, #tpu.memory_space<vmem>>, vector<2x32xbf16>
    %cst_15 = arith.constant dense<0.000000e+00> : vector<2x2xf32>
    %23 = tpu.matmul %22, %21, %cst_15 {dimension_numbers = #tpu.dot_dimension_numbers<[1], [0], [0], [1], [0, 0, 1, 1], [], []>} : vector<2x32xbf16>, vector<32x2xbf16>, vector<2x2xf32> -> vector<2x2xf32>
    %cst_16 = arith.constant 0.000000e+00 : f32
    %24 = vector.broadcast %cst_16 : f32 to vector<2x2xf32>
    %25 = arith.maximumf %23, %24 : vector<2x2xf32>
    %c0_17 = arith.constant 0 : index
    %c0_18 = arith.constant 0 : index
    %26 = vector.load %arg5[%c0_17, %c0_18] : memref<32x2xbf16, #tpu.memory_space<vmem>>, vector<32x2xbf16>
    %27 = arith.truncf %25 : vector<2x2xf32> to vector<2x2xbf16>
    %cst_19 = arith.constant dense<0.000000e+00> : vector<32x2xf32>
    %28 = tpu.matmul %26, %27, %cst_19 {dimension_numbers = #tpu.dot_dimension_numbers<[1], [0], [0], [1], [0, 0, 1, 1], [], []>} : vector<32x2xbf16>, vector<2x2xbf16>, vector<32x2xf32> -> vector<32x2xf32>
    %29 = vector.extract_strided_slice %28 {offsets = [0, 0], sizes = [32, 1], strides = [1, 1]} : vector<32x2xf32> to vector<32x1xf32>
    %30 = vector.extract_strided_slice %28 {offsets = [0, 1], sizes = [32, 1], strides = [1, 1]} : vector<32x2xf32> to vector<32x1xf32>
    %31 = arith.addf %29, %30 : vector<32x1xf32>
    %32 = arith.negf %31 : vector<32x1xf32>
    %33 = math.exp %32 : vector<32x1xf32>
    %cst_20 = arith.constant 1.000000e+00 : f32
    %34 = vector.broadcast %cst_20 : f32 to vector<32x1xf32>
    %35 = arith.addf %34, %33 : vector<32x1xf32>
    %36 = arith.divf %34, %35 : vector<32x1xf32>
    %37 = vector.broadcast %36 : vector<32x1xf32> to vector<32x64xf32>
    %38 = arith.mulf %13, %37 : vector<32x64xf32>
    %c0_21 = arith.constant 0 : index
    %c0_22 = arith.constant 0 : index
    %c0_23 = arith.constant 0 : index
    %39 = vector.load %arg8[%c0_21, %c0_22, %c0_23] : memref<1x32x64xf32, #tpu.memory_space<vmem>>, vector<1x32x64xf32>
    %40 = vector.shape_cast %39 : vector<1x32x64xf32> to vector<32x64xf32>
    %41 = vector.shape_cast %38 : vector<32x64xf32> to vector<1x32x64xf32>
    tpu.vector_store %arg8[%c0_21, %c0_22, %c0_23], %41 {strides = array<i32>} : memref<1x32x64xf32, #tpu.memory_space<vmem>>, vector<1x32x64xf32>,
    %c0_24 = arith.constant 0 : index
    %c0_25 = arith.constant 0 : index
    %c0_26 = arith.constant 0 : index
    %42 = vector.load %arg8[%c0_24, %c0_25, %c0_26] : memref<1x32x64xf32, #tpu.memory_space<vmem>>, vector<1x32x64xf32>
    %43 = vector.shape_cast %42 : vector<1x32x64xf32> to vector<32x64xf32>
    %cst_27 = arith.constant dense<0.000000e+00> : vector<64xf32>
    %44 = vector.multi_reduction <add>, %43, %cst_27 [0] : vector<32x64xf32> to vector<64xf32>
    %45 = vector.shape_cast %44 : vector<64xf32> to vector<1x64xf32>
    %cst_28 = arith.constant 3.200000e+01 : f32
    %46 = vector.broadcast %cst_28 : f32 to vector<1x64xf32>
    %47 = arith.divf %45, %46 : vector<1x64xf32>
    %c0_29 = arith.constant 0 : index
    %c0_30 = arith.constant 0 : index
    %c0_31 = arith.constant 0 : index
    %48 = vector.load %arg8[%c0_29, %c0_30, %c0_31] : memref<1x32x64xf32, #tpu.memory_space<vmem>>, vector<1x32x64xf32>
    %49 = vector.shape_cast %48 : vector<1x32x64xf32> to vector<32x64xf32>
    %cst_32 = arith.constant dense<0xFF800000> : vector<64xf32>
    %50 = vector.multi_reduction <maximumf>, %49, %cst_32 [0] : vector<32x64xf32> to vector<64xf32>
    %51 = vector.shape_cast %50 : vector<64xf32> to vector<1x64xf32>
    %52 = tpu.concatenate %47, %51 in 1 : vector<1x64xf32>, vector<1x64xf32> -> vector<1x128xf32>
    %53 = arith.truncf %52 : vector<1x128xf32> to vector<1x128xbf16>
    %c0_33 = arith.constant 0 : index
    %c0_34 = arith.constant 0 : index
    %54 = vector.load %arg6[%c0_33, %c0_34] : memref<128x64xbf16, #tpu.memory_space<vmem>>, vector<128x64xbf16>
    %cst_35 = arith.constant dense<0.000000e+00> : vector<1x64xf32>
    %55 = tpu.matmul %53, %54, %cst_35 {dimension_numbers = #tpu.dot_dimension_numbers<[1], [0], [0], [1], [0, 0, 1, 1], [], []>} : vector<1x128xbf16>, vector<128x64xbf16>, vector<1x64xf32> -> vector<1x64xf32>
    %c0_36 = arith.constant 0 : index
    %c0_37 = arith.constant 0 : index
    %c0_38 = arith.constant 0 : index
    %56 = vector.load %arg8[%c0_36, %c0_37, %c0_38] : memref<1x32x64xf32, #tpu.memory_space<vmem>>, vector<1x32x64xf32>
    %57 = vector.shape_cast %56 : vector<1x32x64xf32> to vector<32x64xf32>
    %58 = arith.negf %55 : vector<1x64xf32>
    %59 = math.exp %58 : vector<1x64xf32>
    %cst_39 = arith.constant 1.000000e+00 : f32
    %60 = vector.broadcast %cst_39 : f32 to vector<1x64xf32>
    %61 = arith.addf %60, %59 : vector<1x64xf32>
    %62 = arith.divf %60, %61 : vector<1x64xf32>
    %63 = vector.broadcast %62 : vector<1x64xf32> to vector<32x64xf32>
    %64 = arith.mulf %57, %63 : vector<32x64xf32>
    %c0_40 = arith.constant 0 : index
    %c0_41 = arith.constant 0 : index
    %c0_42 = arith.constant 0 : index
    %65 = vector.load %arg8[%c0_40, %c0_41, %c0_42] : memref<1x32x64xf32, #tpu.memory_space<vmem>>, vector<1x32x64xf32>
    %66 = vector.shape_cast %65 : vector<1x32x64xf32> to vector<32x64xf32>
    %67 = vector.shape_cast %64 : vector<32x64xf32> to vector<1x32x64xf32>
    tpu.vector_store %arg8[%c0_40, %c0_41, %c0_42], %67 {strides = array<i32>} : memref<1x32x64xf32, #tpu.memory_space<vmem>>, vector<1x32x64xf32>,
    return
  }
  func.func @transform_0(%arg0: i32) -> (i32, i32, i32) {
    %c0_i32 = arith.constant 0 : i32
    %c0_i32_0 = arith.constant 0 : i32
    %c0_i32_1 = arith.constant 0 : i32
    return %arg0, %c0_i32, %c0_i32_0 : i32, i32, i32
  }
  func.func @transform_1(%arg0: i32) -> (i32, i32) {
    %c0_i32 = arith.constant 0 : i32
    %c0_i32_0 = arith.constant 0 : i32
    %c0_i32_1 = arith.constant 0 : i32
    return %c0_i32, %c0_i32_0 : i32, i32
  }
  func.func @transform_2(%arg0: i32) -> (i32, i32) {
    %c0_i32 = arith.constant 0 : i32
    %c0_i32_0 = arith.constant 0 : i32
    %c0_i32_1 = arith.constant 0 : i32
    return %c0_i32, %c0_i32_0 : i32, i32
  }
  func.func @transform_3(%arg0: i32) -> (i32, i32) {
    %c0_i32 = arith.constant 0 : i32
    %c0_i32_0 = arith.constant 0 : i32
    %c0_i32_1 = arith.constant 0 : i32
    return %c0_i32, %c0_i32_0 : i32, i32
  }
  func.func @transform_4(%arg0: i32) -> (i32, i32) {
    %c0_i32 = arith.constant 0 : i32
    %c0_i32_0 = arith.constant 0 : i32
    %c0_i32_1 = arith.constant 0 : i32
    return %c0_i32, %c0_i32_0 : i32, i32
  }
  func.func @transform_5(%arg0: i32) -> (i32, i32) {
    %c0_i32 = arith.constant 0 : i32
    %c0_i32_0 = arith.constant 0 : i32
    %c0_i32_1 = arith.constant 0 : i32
    return %c0_i32, %c0_i32_0 : i32, i32
  }
  func.func @transform_6(%arg0: i32) -> (i32, i32, i32) {
    %c0_i32 = arith.constant 0 : i32
    %c0_i32_0 = arith.constant 0 : i32
    %c0_i32_1 = arith.constant 0 : i32
    return %arg0, %c0_i32, %c0_i32_0 : i32, i32, i32
  }
  func.func @transform_7(%arg0: i32) -> (i32, i32, i32) {
    %c0_i32 = arith.constant 0 : i32
    %c0_i32_0 = arith.constant 0 : i32
    %c0_i32_1 = arith.constant 0 : i32
    return %arg0, %c0_i32, %c0_i32_0 : i32, i32, i32
  }
}

</mosaic_0001>

<llo_original>
// kernel: forward.2
$region0: #{forward.2}
  #allocation0 [shape = 'u32[]', space=smem, size = 0x4, offset = 0x4, fixed_abs, tag = 'smem constant byte address 0x4 - core index']
  #allocation1 [shape = 'u32[144,128]{1,0:T(1,128)}', space=vmem, size = 0x12000, scoped, tag = 'internal scratch']
  %s0 = inlined_call_operand.vmem [shape: bf16[2,64,64], index: 0, kind: input, shape index: {}]
  %s1 = inlined_call_operand.vmem [shape: bf16[40,64], index: 1, kind: input, shape index: {}]
  %s2 = inlined_call_operand.vmem [shape: f32[32,1], index: 2, kind: input, shape index: {}]
  %s3 = inlined_call_operand.vmem [shape: bf16[2,32], index: 3, kind: input, shape index: {}]
  %s4 = inlined_call_operand.vmem [shape: bf16[32,2], index: 4, kind: input, shape index: {}]
  %s5 = inlined_call_operand.vmem [shape: bf16[128,64], index: 5, kind: input, shape index: {}]
  %s6 = inlined_call_operand.hbm [shape: f32[2,1,8], index: 6, kind: output, shape index: {0}]
  %s7 = inlined_call_operand.vmem [shape: f32[2,32,64], index: 7, kind: output, shape index: {1}]
  %8 = xla_tuple %s6, %s7
  %s9 = sld [smem:[#allocation0]]
  $region65: #{forward.2} parent=0
    _
  %s11 = ssub.s32 1, %s9
  %s12 = scalar_select 0, %s11, %s9
  $region1: #{forward.2} parent=0
    #allocation2 [shape = 'u8[1024]{0}', space=vmem, size = 0x400, scoped, tag = 'output window, operand 0']
    #allocation3 [shape = 's32[2]{0}', space=sflag, size = 0x8, scoped, tag = 'scoped memory for forward.2']
    %13 = vsyncpa [#allocation3], 0
    %s14 = scalar_lea.sflag [#allocation3], 1
    %15 = vsyncpa %s14, 0
    loop: start=0, step=1, limit=4
    $region2: #{forward.2} parent=1 // loop_pre_header
      _
    $region3: #{forward.2} parent=1 // loop_header
      %s17 = sphi 0, %s21
      %p18 = scmp.ge.s32.totalorder %s17, 4
      %s27 = sphi 0, %s29
      %s30 = sphi 0, %s27
      %s31 = sphi 0, %s30
      %s47 = sphi 0, %s31
      %s51 = sphi 0, %s51
      %s53 = sphi 0, %s51
      %s54 = sphi 0, %s53
      %s68 = sphi 0, %s54
      %s72 = sphi 0, %s72
      %s74 = sphi 0, %s72
      %s75 = sphi 0, %s74
      %s89 = sphi 0, %s75
      %s93 = sphi 0, %s93
      %s95 = sphi 0, %s93
      %s96 = sphi 0, %s95
      %s110 = sphi 0, %s96
      %s114 = sphi 0, %s114
      %s116 = sphi 0, %s114
      %s117 = sphi 0, %s116
      %s131 = sphi 0, %s117
      %s135 = sphi 0, %s135
      %s137 = sphi 0, %s135
      %s138 = sphi 0, %s137
      %s152 = sphi 0, %s138
      %s158 = sphi 0, %s160
      %s161 = sphi 0, %s158
      %s162 = sphi 0, %s161
      %s178 = sphi 0, %s162
      %s184 = sphi 0, %s186
      %s187 = sphi 0, %s184
      %s188 = sphi 0, %s187
      %s204 = sphi 0, %s188
    $region4: #{forward.2} parent=1 // loop_header_branch
      %20 = sbr.rel (%p18) target = $region8
    $region5: #{forward.2} parent=1 // loop_body
      %s22 = ssub.s32 %s17, 1
      %s23 = ssub.s32 %s17, 2
      %s24 = sadd.s32 %s17, 1
      %s25 = ssub.s32 %s17, %s24
      %p26 = scmp.eq.s32.totalorder %s25, 0
      %s28 = sadd.s32 %s27, 1
      %s29 = scalar_select %p26, %s27, %s28
      %p32 = pneg %p26
      %p33 = scmp.eq.s32.totalorder %s17, 1
      %p34 = por %p32, %p33
      %p35 = scmp.ne.s32.totalorder %s27, %s30
      %p36 = scmp.eq.s32.totalorder %s17, 0
      %p37 = por %p35, %p36
      %p38 = scmp.ne.s32.totalorder %s27, %s30
      %p39 = scmp.eq.s32.totalorder %s22, 1
      %p40 = por %p38, %p39
      %p41 = scmp.ne.s32.totalorder %s30, %s31
      %p42 = scmp.eq.s32.totalorder %s22, 0
      %p43 = por %p41, %p42
      %p44 = scmp.ne.s32.totalorder %s30, %s31
      %p45 = scmp.eq.s32.totalorder %s23, 1
      %p46 = por %p44, %p45
      %p48 = scmp.ne.s32.totalorder %s31, %s47
      %p49 = scmp.eq.s32.totalorder %s23, 0
      %p50 = por %p48, %p49
      %s52 = sadd.s32 %s51, 1
      %p55 = scmp.eq.s32.totalorder %s17, 1
      %p56 = scmp.ne.s32.totalorder %s51, %s53
      %p57 = scmp.eq.s32.totalorder %s17, 0
      %p58 = por %p56, %p57
      %p59 = scmp.ne.s32.totalorder %s51, %s53
      %p60 = scmp.eq.s32.totalorder %s22, 1
      %p61 = por %p59, %p60
      %p62 = scmp.ne.s32.totalorder %s53, %s54
      %p63 = scmp.eq.s32.totalorder %s22, 0
      %p64 = por %p62, %p63
      %p65 = scmp.ne.s32.totalorder %s53, %s54
      %p66 = scmp.eq.s32.totalorder %s23, 1
      %p67 = por %p65, %p66
      %p69 = scmp.ne.s32.totalorder %s54, %s68
      %p70 = scmp.eq.s32.totalorder %s23, 0
      %p71 = por %p69, %p70
      %s73 = sadd.s32 %s72, 1
      %p76 = scmp.eq.s32.totalorder %s17, 1
      %p77 = scmp.ne.s32.totalorder %s72, %s74
      %p78 = scmp.eq.s32.totalorder %s17, 0
      %p79 = por %p77, %p78
      %p80 = scmp.ne.s32.totalorder %s72, %s74
      %p81 = scmp.eq.s32.totalorder %s22, 1
      %p82 = por %p80, %p81
      %p83 = scmp.ne.s32.totalorder %s74, %s75
      %p84 = scmp.eq.s32.totalorder %s22, 0
      %p85 = por %p83, %p84
      %p86 = scmp.ne.s32.totalorder %s74, %s75
      %p87 = scmp.eq.s32.totalorder %s23, 1
      %p88 = por %p86, %p87
      %p90 = scmp.ne.s32.totalorder %s75, %s89
      %p91 = scmp.eq.s32.totalorder %s23, 0
      %p92 = por %p90, %p91
      %s94 = sadd.s32 %s93, 1
      %p97 = scmp.eq.s32.totalorder %s17, 1
      %p98 = scmp.ne.s32.totalorder %s93, %s95
      %p99 = scmp.eq.s32.totalorder %s17, 0
      %p100 = por %p98, %p99
      %p101 = scmp.ne.s32.totalorder %s93, %s95
      %p102 = scmp.eq.s32.totalorder %s22, 1
      %p103 = por %p101, %p102
      %p104 = scmp.ne.s32.totalorder %s95, %s96
      %p105 = scmp.eq.s32.totalorder %s22, 0
      %p106 = por %p104, %p105
      %p107 = scmp.ne.s32.totalorder %s95, %s96
      %p108 = scmp.eq.s32.totalorder %s23, 1
      %p109 = por %p107, %p108
      %p111 = scmp.ne.s32.totalorder %s96, %s110
      %p112 = scmp.eq.s32.totalorder %s23, 0
      %p113 = por %p111, %p112
      %s115 = sadd.s32 %s114, 1
      %p118 = scmp.eq.s32.totalorder %s17, 1
      %p119 = scmp.ne.s32.totalorder %s114, %s116
      %p120 = scmp.eq.s32.totalorder %s17, 0
      %p121 = por %p119, %p120
      %p122 = scmp.ne.s32.totalorder %s114, %s116
      %p123 = scmp.eq.s32.totalorder %s22, 1
      %p124 = por %p122, %p123
      %p125 = scmp.ne.s32.totalorder %s116, %s117
      %p126 = scmp.eq.s32.totalorder %s22, 0
      %p127 = por %p125, %p126
      %p128 = scmp.ne.s32.totalorder %s116, %s117
      %p129 = scmp.eq.s32.totalorder %s23, 1
      %p130 = por %p128, %p129
      %p132 = scmp.ne.s32.totalorder %s117, %s131
      %p133 = scmp.eq.s32.totalorder %s23, 0
      %p134 = por %p132, %p133
      %s136 = sadd.s32 %s135, 1
      %p139 = scmp.eq.s32.totalorder %s17, 1
      %p140 = scmp.ne.s32.totalorder %s135, %s137
      %p141 = scmp.eq.s32.totalorder %s17, 0
      %p142 = por %p140, %p141
      %p143 = scmp.ne.s32.totalorder %s135, %s137
      %p144 = scmp.eq.s32.totalorder %s22, 1
      %p145 = por %p143, %p144
      %p146 = scmp.ne.s32.totalorder %s137, %s138
      %p147 = scmp.eq.s32.totalorder %s22, 0
      %p148 = por %p146, %p147
      %p149 = scmp.ne.s32.totalorder %s137, %s138
      %p150 = scmp.eq.s32.totalorder %s23, 1
      %p151 = por %p149, %p150
      %p153 = scmp.ne.s32.totalorder %s138, %s152
      %p154 = scmp.eq.s32.totalorder %s23, 0
      %p155 = por %p153, %p154
      %s156 = ssub.s32 %s17, %s24
      %p157 = scmp.eq.s32.totalorder %s156, 0
      %s159 = sadd.s32 %s158, 1
      %s160 = scalar_select %p157, %s158, %s159
      %p163 = pneg %p157
      %p164 = scmp.eq.s32.totalorder %s17, 1
      %p165 = por %p163, %p164
      %p166 = scmp.ne.s32.totalorder %s158, %s161
      %p167 = scmp.eq.s32.totalorder %s17, 0
      %p168 = por %p166, %p167
      %p169 = scmp.ne.s32.totalorder %s158, %s161
      %p170 = scmp.eq.s32.totalorder %s22, 1
      %p171 = por %p169, %p170
      %p172 = scmp.ne.s32.totalorder %s161, %s162
      %p173 = scmp.eq.s32.totalorder %s22, 0
      %p174 = por %p172, %p173
      %p175 = scmp.ne.s32.totalorder %s161, %s162
      %p176 = scmp.eq.s32.totalorder %s23, 1
      %p177 = por %p175, %p176
      %p179 = scmp.ne.s32.totalorder %s162, %s178
      %p180 = scmp.eq.s32.totalorder %s23, 0
      %p181 = por %p179, %p180
      %s182 = ssub.s32 %s17, %s24
      %p183 = scmp.eq.s32.totalorder %s182, 0
      %s185 = sadd.s32 %s184, 1
      %s186 = scalar_select %p183, %s184, %s185
      %p189 = pneg %p183
      %p190 = scmp.eq.s32.totalorder %s17, 1
      %p191 = por %p189, %p190
      %p192 = scmp.ne.s32.totalorder %s184, %s187
      %p193 = scmp.eq.s32.totalorder %s17, 0
      %p194 = por %p192, %p193
      %p195 = scmp.ne.s32.totalorder %s184, %s187
      %p196 = scmp.eq.s32.totalorder %s22, 1
      %p197 = por %p195, %p196
      %p198 = scmp.ne.s32.totalorder %s187, %s188
      %p199 = scmp.eq.s32.totalorder %s22, 0
      %p200 = por %p198, %p199
      %p201 = scmp.ne.s32.totalorder %s187, %s188
      %p202 = scmp.eq.s32.totalorder %s23, 1
      %p203 = por %p201, %p202
      %p205 = scmp.ne.s32.totalorder %s188, %s204
      %p206 = scmp.eq.s32.totalorder %s23, 0
      %p207 = por %p205, %p206
      %p208 = scmp.le.s32.totalorder 1, %s17
      %p209 = scmp.lt.s32.totalorder %s17, 3
      %p210 = pnand %p208, %p209
      %p211 = pneg %p210
      // Predicated region
      $region9: #{forward.2} parent=5 // pred_check
        _
      $region10: #{forward.2} parent=5 // pred_check_branch
        %213 = sbr.rel (%p210) target = $region12
      $region11: #{forward.2} parent=5 // pred_region
        %s214 = ssub.s32 %s17, 1
        // Predicated region
        $region13: #{forward.2} parent=11 // pred_check
          %p215 = pneg %p64
        $region14: #{forward.2} parent=11 // pred_check_branch
          %217 = sbr.rel (%p215) target = $region16
        $region15: #{forward.2} parent=11 // pred_region
          _
        $region16: #{forward.2} parent=11 // pred_fallthru
          _
        // Predicated region
        $region17: #{forward.2} parent=11 // pred_check
          %p218 = pneg %p85
        $region18: #{forward.2} parent=11 // pred_check_branch
          %220 = sbr.rel (%p218) target = $region20
        $region19: #{forward.2} parent=11 // pred_region
          _
        $region20: #{forward.2} parent=11 // pred_fallthru
          _
        // Predicated region
        $region21: #{forward.2} parent=11 // pred_check
          %p221 = pneg %p106
        $region22: #{forward.2} parent=11 // pred_check_branch
          %223 = sbr.rel (%p221) target = $region24
        $region23: #{forward.2} parent=11 // pred_region
          _
        $region24: #{forward.2} parent=11 // pred_fallthru
          _
        // Predicated region
        $region25: #{forward.2} parent=11 // pred_check
          %p224 = pneg %p127
        $region26: #{forward.2} parent=11 // pred_check_branch
          %226 = sbr.rel (%p224) target = $region28
        $region27: #{forward.2} parent=11 // pred_region
          _
        $region28: #{forward.2} parent=11 // pred_fallthru
          _
        // Predicated region
        $region29: #{forward.2} parent=11 // pred_check
          %p227 = pneg %p148
        $region30: #{forward.2} parent=11 // pred_check_branch
          %229 = sbr.rel (%p227) target = $region32
        $region31: #{forward.2} parent=11 // pred_region
          _
        $region32: #{forward.2} parent=11 // pred_fallthru
          _
      $region12: #{forward.2} parent=5 // pred_fallthru
        _
      %p230 = scmp.lt.s32.totalorder %s17, 2
      // Predicated region
      $region33: #{forward.2} parent=5 // pred_check
        %p231 = pneg %p230
      $region34: #{forward.2} parent=5 // pred_check_branch
        %233 = sbr.rel (%p231) target = $region36
      $region35: #{forward.2} parent=5 // pred_region
        // Predicated region
        $region37: #{forward.2} parent=35 // pred_check
          %p234 = pneg %p37
        $region38: #{forward.2} parent=35 // pred_check_branch
          %236 = sbr.rel (%p234) target = $region40
        $region39: #{forward.2} parent=35 // pred_region
          %p237 = scmp.lt.s32.totalorder %s17, 1
          %s238 = scalar_select %p237, %s17, 1
          %s239 = smul.addr %s238, 8
          %s240 = smul.addr %s239, 4
          %s241 = scalar_lea.vmem %s0, %s240
        $region40: #{forward.2} parent=35 // pred_fallthru
          _
      $region36: #{forward.2} parent=5 // pred_fallthru
        _
      %p242 = scmp.le.s32.totalorder 1, %s17
      %p243 = scmp.lt.s32.totalorder %s17, 3
      %p244 = pnand %p242, %p243
      %p245 = pneg %p244
      // Predicated region
      $region41: #{forward.2} parent=5 // pred_check
        _
      $region42: #{forward.2} parent=5 // pred_check_branch
        %247 = sbr.rel (%p244) target = $region44
      $region43: #{forward.2} parent=5 // pred_region
        %s248 = ssub.s32 %s17, 1
        %p249 = scmp.lt.s32.totalorder %s22, 1
        %s250 = scalar_select %p249, %s22, 1
        %s251 = smul.addr %s250, 8
        %s252 = smul.addr %s251, 4
        %s253 = scalar_lea.vmem %s0, %s252
        %p254 = pneg %p43
        %p255 = pneg %p40
        %p256 = pneg %p64
        %p257 = pneg %p61
        %p258 = pneg %p85
        %p259 = pneg %p82
        %p260 = pneg %p106
        %p261 = pneg %p103
        %p262 = pneg %p127
        %p263 = pneg %p124
        %p264 = pneg %p148
        %p265 = pneg %p145
        %p266 = pneg %p174
        %p267 = pneg %p171
        %s268 = sand.u32 %s161, 1
        %s269 = scalar_lea.sflag [#allocation3], %s268
        %s270 = sand.u32 %s161, 1
        %s271 = scalar_lea.vmem [#allocation2], %s270
        %p272 = pneg %p200
        %p273 = pneg %p197
        %p274 = scmp.lt.s32.totalorder %s22, 1
        %s275 = scalar_select %p274, %s22, 1
        %s276 = smul.addr %s275, 4
        %s277 = smul.addr %s276, 8
        %s278 = scalar_lea.vmem %s7, %s277
        %p279 = scmp.lt.s32.totalorder %s22, 1
        %s280 = scalar_select %p279, %s22, 1
        %s281 = smul.addr %s280, 8
        %s282 = smul.addr %s281, 4
        %s283 = scalar_lea.vmem %s0, %s282
        %p284 = scmp.lt.s32.totalorder %s22, 1
        %s285 = scalar_select %p284, %s22, 1
        %s286 = smul.addr %s285, 4
        %s287 = smul.addr %s286, 8
        %s288 = scalar_lea.vmem %s7, %s287
        %v290 = vld [vmem:[%s283] sm:$0xf]
        %v291 = vld [vmem:[%s283 + $0x4] sm:$0xf]
        %v292 = vld [vmem:[%s283 + $0x8] sm:$0xf]
        %v293 = vld [vmem:[%s283 + $0xc] sm:$0xf]
        %v294 = vld [vmem:[%s283 + $0x10] sm:$0xf]
        %v295 = vld [vmem:[%s283 + $0x14] sm:$0xf]
        %v296 = vld [vmem:[%s283 + $0x18] sm:$0xf]
        %v297 = vld [vmem:[%s283 + $0x1c] sm:$0xf]
        %v298 = vld [vmem:[%s1] sm:$0xf]
        %v299 = vld [vmem:[%s1 + $0x4] sm:$0xf]
        %v300 = vld [vmem:[%s1 + $0x8] sm:$0xf]
        %v301 = vld [vmem:[%s1 + $0xc] sm:$0xf]
        %v302 = vld [vmem:[%s1 + $0x10] sm:$0xf]
        %v308 = vunpack.c.l.b16 %v298
        %v309 = vunpack.c.l.b16 %v299
        %v310 = vunpack.c.l.b16 %v300
        %v311 = vunpack.c.l.b16 %v301
        %v312 = vunpack.c.l.b16 %v302
        %v313 = vpack.c.b16 %v309, %v308
        %v314 = vpack.c.b16 %v311, %v310
        %v315 = vpack.c.b16 %v312, %v312
        %v324 = vunpack.c.l.b16 %v290
        %v325 = vunpack.c.l.b16 %v291
        %v326 = vunpack.c.l.b16 %v292
        %v327 = vunpack.c.l.b16 %v293
        %v328 = vunpack.c.l.b16 %v294
        %v329 = vunpack.c.l.b16 %v295
        %v330 = vunpack.c.l.b16 %v296
        %v331 = vunpack.c.l.b16 %v297
        %v332 = vpack.c.b16 %v325, %v324
        %v333 = vpack.c.b16 %v327, %v326
        %v334 = vpack.c.b16 %v329, %v328
        %v335 = vpack.c.b16 %v331, %v330
        %vm340 = vcmask 523264
        %v342 = vsel %vm340, %v313, 0
        %v345 = vsel %vm340, %v314, 0
        %v348 = vsel %vm340, %v315, 0
        %350 = vmatprep.subr.bf16.mxu0 0
        %351 = vmatpush1.bf16.msra.mxu0 0
        %352 = vmatprep.subr.bf16.mxu0 0
        %353 = vmatpush1.bf16.msra.mxu0 0
        %354 = vmatprep.subr.bf16.mxu0 0
        %355 = vmatpush1.bf16.msra.mxu0 0
        %356 = vmatprep.subr.bf16.mxu0 0
        %357 = vmatpush1.bf16.msra.mxu0 0
        %358 = vmatprep.subr.bf16.mxu0 0
        %359 = vmatpush1.bf16.msra.mxu0 %v335
        %360 = vmatprep.subr.bf16.mxu0 0
        %361 = vmatpush1.bf16.msra.mxu0 %v334
        %362 = vmatprep.subr.bf16.mxu0 0
        %363 = vmatpush1.bf16.msra.mxu0 %v333
        %364 = vmatprep.subr.bf16.mxu0 0
        %365 = vmatpush1.bf16.msra.mxu0 %v332
        %366 = vmatprep.subr.bf16.mxu0 0
        %367 = vmatpush2.bf16.msra.mxu0 0
        %368 = vmatprep.subr.bf16.mxu0 0
        %369 = vmatpush2.bf16.msra.mxu0 0
        %370 = vmatprep.subr.bf16.mxu0 0
        %371 = vmatpush2.bf16.msra.mxu0 0
        %372 = vmatprep.subr.bf16.mxu0 0
        %373 = vmatpush2.bf16.msra.mxu0 0
        %374 = vmatprep.subr.bf16.mxu0 0
        %375 = vmatpush2.bf16.msra.mxu0 0
        %376 = vmatprep.subr.bf16.mxu0 0
        %377 = vmatpush2.bf16.msra.mxu0 0
        %378 = vmatprep.subr.bf16.mxu0 0
        %379 = vmatpush2.bf16.msra.mxu0 0
        %380 = vmatprep.subr.bf16.mxu0 0
        %381 = vmatpush2.bf16.msra.mxu0 0
        %382 = vmatprep.mubr.bf16.mxu0 0
        %383 = vmatmul.mubr.bf16.gmra.mxu0 %v342
        %v384 = vpop.f32.mrf.mxu0
        %v385 = vadd.f32 0.0, %v384
        %v386 = vpop.f32.mrf.mxu0
        %v387 = vpop.f32.mrf.mxu0
        %v388 = vadd.f32 0.0, %v387
        %v389 = vpop.f32.mrf.mxu0
        %390 = vmatprep.mubr.bf16.mxu0 0
        %391 = vmatmul.mubr.bf16.gmra.mxu0 %v345
        %v392 = vpop.f32.mrf.mxu0
        %v393 = vadd.f32 0.0, %v392
        %v394 = vpop.f32.mrf.mxu0
        %v395 = vpop.f32.mrf.mxu0
        %v396 = vadd.f32 0.0, %v395
        %v397 = vpop.f32.mrf.mxu0
        %398 = vmatprep.mubr.bf16.mxu0 0
        %399 = vmatmul.mubr.bf16.gmra.mxu0 %v348
        %v400 = vpop.f32.mrf.mxu0
        %v401 = vadd.f32 0.0, %v400
        %v402 = vpop.f32.mrf.mxu0
        %v403 = vpop.f32.mrf.mxu0
        %v404 = vpop.f32.mrf.mxu0
        %405 = vdwg.mxu0
        %v406 = vsel %vm340, %v385, -inf
        %407 = vmax.xlane.f32.xlu0 %v406
        %v408 = vpop.xlane.xlu0 %407
        %v410 = vlaneseq
        %v411 = vand.u32 %v410, 127
        %v412 = vlaneseq
        %v413 = vshrl.u32 %v412, 7
        %v414 = vsub.s32 %v411, %v413
        %v415 = vrot.slane %v408, %v414
        %vm417 = vcmask 57344
        %418 = vst.msk [vmem:[%s271] sm:$0x1] %vm417, %v415
        %v419 = vld [vmem:[%s2] sm:$0xff]
        %v420 = vld [vmem:[%s2 + $0x8] sm:$0xff]
        %v421 = vld [vmem:[%s2 + $0x10] sm:$0xff]
        %v422 = vld [vmem:[%s2 + $0x18] sm:$0xff]
        %424 = vset.pattern.permute.xlu0 0
        %425 = vperm.xlu0 %424, %v419
        %v426 = vpop.permute.xlu0 %425
        %429 = vset.pattern.permute.xlu0 0
        %430 = vperm.xlu0 %429, %v420
        %v431 = vpop.permute.xlu0 %430
        %434 = vset.pattern.permute.xlu0 0
        %435 = vperm.xlu0 %434, %v421
        %v436 = vpop.permute.xlu0 %435
        %439 = vset.pattern.permute.xlu0 0
        %440 = vperm.xlu0 %439, %v422
        %v441 = vpop.permute.xlu0 %440
        %v443 = vadd.f32 %v388, %v426
        %v444 = vadd.f32 %v393, %v431
        %v445 = vadd.f32 %v396, %v436
        %v446 = vadd.f32 %v401, %v441
        %v447 = vsel %vm340, %v443, 0.0
        %448 = vadd.xlane.f32.xlu0 %v447
        %v449 = vpop.xlane.xlu0 %448
        %v450 = vsel %vm340, %v444, 0.0
        %451 = vadd.xlane.f32.xlu0 %v450
        %v452 = vpop.xlane.xlu0 %451
        %v453 = vsel %vm340, %v445, 0.0
        %454 = vadd.xlane.f32.xlu0 %v453
        %v455 = vpop.xlane.xlu0 %454
        %v456 = vsel %vm340, %v446, 0.0
        %457 = vadd.xlane.f32.xlu0 %v456
        %v458 = vpop.xlane.xlu0 %457
        %v459 = vrcp.pop 64.0
        %v460 = vmul.f32 %v449, %v459
        %v461 = vmul.f32 %v452, %v459
        %v462 = vmul.f32 %v455, %v459
        %v463 = vmul.f32 %v458, %v459
        %v464 = vsel %vm340, %v443, -inf
        %465 = vmax.xlane.f32.xlu0 %v464
        %v466 = vpop.xlane.xlu0 %465
        %v467 = vsel %vm340, %v444, -inf
        %468 = vmax.xlane.f32.xlu0 %v467
        %v469 = vpop.xlane.xlu0 %468
        %v470 = vsel %vm340, %v445, -inf
        %471 = vmax.xlane.f32.xlu0 %v470
        %v472 = vpop.xlane.xlu0 %471
        %v473 = vsel %vm340, %v446, -inf
        %474 = vmax.xlane.f32.xlu0 %v473
        %v475 = vpop.xlane.xlu0 %474
        %vm476 = vcmask 7168
        %v477 = vsel %vm476, %v460, %v466
        %v478 = vsel %vm476, %v461, %v469
        %v479 = vsel %vm476, %v462, %v472
        %v480 = vsel %vm476, %v463, %v475
        %v481 = vpack.c.bf16 %v478, %v477
        %v482 = vpack.c.bf16 %v480, %v479
        %v483 = vld [vmem:[%s3] sm:$0x1]
        %vm484 = vcmask 261120
        %v486 = vsel %vm484, %v483, 0
        %488 = vmatprep.subr.bf16.mxu0 0
        %489 = vmatpush1.bf16.msra.mxu0 0
        %490 = vmatprep.subr.bf16.mxu0 0
        %491 = vmatpush1.bf16.msra.mxu0 0
        %492 = vmatprep.subr.bf16.mxu0 0
        %493 = vmatpush1.bf16.msra.mxu0 0
        %494 = vmatprep.subr.bf16.mxu0 0
        %495 = vmatpush1.bf16.msra.mxu0 0
        %496 = vmatprep.subr.bf16.mxu0 0
        %497 = vmatpush1.bf16.msra.mxu0 0
        %498 = vmatprep.subr.bf16.mxu0 0
        %499 = vmatpush1.bf16.msra.mxu0 0
        %500 = vmatprep.subr.bf16.mxu0 0
        %501 = vmatpush1.bf16.msra.mxu0 %v482
        %502 = vmatprep.subr.bf16.mxu0 0
        %503 = vmatpush1.bf16.msra.mxu0 %v481
        %504 = vmatprep.subr.bf16.mxu0 0
        %505 = vmatpush2.bf16.msra.mxu0 0
        %506 = vmatprep.subr.bf16.mxu0 0
        %507 = vmatpush2.bf16.msra.mxu0 0
        %508 = vmatprep.subr.bf16.mxu0 0
        %509 = vmatpush2.bf16.msra.mxu0 0
        %510 = vmatprep.subr.bf16.mxu0 0
        %511 = vmatpush2.bf16.msra.mxu0 0
        %512 = vmatprep.subr.bf16.mxu0 0
        %513 = vmatpush2.bf16.msra.mxu0 0
        %514 = vmatprep.subr.bf16.mxu0 0
        %515 = vmatpush2.bf16.msra.mxu0 0
        %516 = vmatprep.subr.bf16.mxu0 0
        %517 = vmatpush2.bf16.msra.mxu0 0
        %518 = vmatprep.subr.bf16.mxu0 0
        %519 = vmatpush2.bf16.msra.mxu0 0
        %520 = vmatprep.mubr.bf16.mxu0 0
        %521 = vmatmul.mubr.bf16.gmra.mxu0 %v486
        %v522 = vpop.f32.mrf.mxu0
        %v523 = vadd.f32 0.0, %v522
        %v524 = vpop.f32.mrf.mxu0
        %v525 = vpop.f32.mrf.mxu0
        %v526 = vpop.f32.mrf.mxu0
        %527 = vdwg.mxu0
        %v528 = vmax.f32 %v523, 0.0
        %v529 = vld [vmem:[%s4] sm:$0xf]
        %v530 = vld [vmem:[%s4 + $0x4] sm:$0xf]
        %v531 = vld [vmem:[%s4 + $0x8] sm:$0xf]
        %v532 = vld [vmem:[%s4 + $0xc] sm:$0xf]
        %v533 = vpack.c.bf16 %v528, %v528
        %v538 = vunpack.c.l.b16 %v529
        %v539 = vunpack.c.l.b16 %v530
        %v540 = vunpack.c.l.b16 %v531
        %v541 = vunpack.c.l.b16 %v532
        %v542 = vpack.c.b16 %v539, %v538
        %v543 = vpack.c.b16 %v541, %v540
        %vm544 = vcmask 15360
        %v546 = vsel %vm544, %v542, 0
        %v549 = vsel %vm544, %v543, 0
        %vm551 = vcmask 1040384
        %v553 = vsel %vm551, %v533, 0
        %555 = vmatprep.subr.bf16.mxu0 0
        %556 = vmatpush1.bf16.msra.mxu0 0
        %557 = vmatprep.subr.bf16.mxu0 0
        %558 = vmatpush1.bf16.msra.mxu0 0
        %559 = vmatprep.subr.bf16.mxu0 0
        %560 = vmatpush1.bf16.msra.mxu0 0
        %561 = vmatprep.subr.bf16.mxu0 0
        %562 = vmatpush1.bf16.msra.mxu0 0
        %563 = vmatprep.subr.bf16.mxu0 0
        %564 = vmatpush1.bf16.msra.mxu0 0
        %565 = vmatprep.subr.bf16.mxu0 0
        %566 = vmatpush1.bf16.msra.mxu0 0
        %567 = vmatprep.subr.bf16.mxu0 0
        %568 = vmatpush1.bf16.msra.mxu0 0
        %569 = vmatprep.subr.bf16.mxu0 0
        %570 = vmatpush1.bf16.msra.mxu0 %v553
        %571 = vmatprep.subr.bf16.mxu0 0
        %572 = vmatpush2.bf16.msra.mxu0 0
        %573 = vmatprep.subr.bf16.mxu0 0
        %574 = vmatpush2.bf16.msra.mxu0 0
        %575 = vmatprep.subr.bf16.mxu0 0
        %576 = vmatpush2.bf16.msra.mxu0 0
        %577 = vmatprep.subr.bf16.mxu0 0
        %578 = vmatpush2.bf16.msra.mxu0 0
        %579 = vmatprep.subr.bf16.mxu0 0
        %580 = vmatpush2.bf16.msra.mxu0 0
        %581 = vmatprep.subr.bf16.mxu0 0
        %582 = vmatpush2.bf16.msra.mxu0 0
        %583 = vmatprep.subr.bf16.mxu0 0
        %584 = vmatpush2.bf16.msra.mxu0 0
        %585 = vmatprep.subr.bf16.mxu0 0
        %586 = vmatpush2.bf16.msra.mxu0 0
        %587 = vmatprep.mubr.bf16.mxu0 0
        %588 = vmatmul.mubr.bf16.gmra.mxu0 %v546
        %v589 = vpop.f32.mrf.mxu0
        %v590 = vadd.f32 0.0, %v589
        %v591 = vpop.f32.mrf.mxu0
        %v592 = vpop.f32.mrf.mxu0
        %v593 = vadd.f32 0.0, %v592
        %v594 = vpop.f32.mrf.mxu0
        %595 = vmatprep.mubr.bf16.mxu0 0
        %596 = vmatmul.mubr.bf16.gmra.mxu0 %v549
        %v597 = vpop.f32.mrf.mxu0
        %v598 = vadd.f32 0.0, %v597
        %v599 = vpop.f32.mrf.mxu0
        %v600 = vpop.f32.mrf.mxu0
        %v601 = vadd.f32 0.0, %v600
        %v602 = vpop.f32.mrf.mxu0
        %603 = vdwg.mxu0
        %608 = vrot.lane.b32.xlu0 %v590, 127
        %v609 = vpop.permute.xlu0 %608
        %610 = vrot.lane.b32.xlu0 %v593, 127
        %v611 = vpop.permute.xlu0 %610
        %612 = vrot.lane.b32.xlu0 %v598, 127
        %v613 = vpop.permute.xlu0 %612
        %614 = vrot.lane.b32.xlu0 %v601, 127
        %v615 = vpop.permute.xlu0 %614
        %v620 = vadd.f32 %v590, %v609
        %v621 = vadd.f32 %v593, %v611
        %v622 = vadd.f32 %v598, %v613
        %v623 = vadd.f32 %v601, %v615
        %v624 = vxor.u32 %v620, 2147483648
        %v625 = vxor.u32 %v621, 2147483648
        %v626 = vxor.u32 %v622, 2147483648
        %v627 = vxor.u32 %v623, 2147483648
        %v628 = vmul.f32 %v624, 1.442695
        %v629 = vpow.pop %v628
        %v630 = vmul.f32 %v625, 1.442695
        %v631 = vpow.pop %v630
        %v632 = vmul.f32 %v626, 1.442695
        %v633 = vpow.pop %v632
        %v634 = vmul.f32 %v627, 1.442695
        %v635 = vpow.pop %v634
        %v636 = vadd.f32 %v629, 1.0
        %v637 = vadd.f32 %v631, 1.0
        %v638 = vadd.f32 %v633, 1.0
        %v639 = vadd.f32 %v635, 1.0
        %v640 = vrcp.pop %v636
        %v641 = vmul.f32 1.0, %v640
        %v642 = vrcp.pop %v637
        %v643 = vmul.f32 1.0, %v642
        %v644 = vrcp.pop %v638
        %v645 = vmul.f32 1.0, %v644
        %v646 = vrcp.pop %v639
        %v647 = vmul.f32 1.0, %v646
        %649 = vset.pattern.permute.xlu0 0
        %650 = vperm.xlu0 %649, %v641
        %v651 = vpop.permute.xlu0 %650
        %654 = vset.pattern.permute.xlu0 0
        %655 = vperm.xlu0 %654, %v643
        %v656 = vpop.permute.xlu0 %655
        %659 = vset.pattern.permute.xlu0 0
        %660 = vperm.xlu0 %659, %v645
        %v661 = vpop.permute.xlu0 %660
        %664 = vset.pattern.permute.xlu0 0
        %665 = vperm.xlu0 %664, %v647
        %v666 = vpop.permute.xlu0 %665
        %v668 = vmul.f32 %v443, %v651
        %v669 = vmul.f32 %v444, %v656
        %v670 = vmul.f32 %v445, %v661
        %v671 = vmul.f32 %v446, %v666
        %672 = vst.msk [vmem:[%s288] sm:$0xff] %vm340, %v668
        %673 = vst.msk [vmem:[%s288 + $0x8] sm:$0xff] %vm340, %v669
        %674 = vst.msk [vmem:[%s288 + $0x10] sm:$0xff] %vm340, %v670
        %675 = vst.msk [vmem:[%s288 + $0x18] sm:$0xff] %vm340, %v671
        %v676 = vld [vmem:[%s288] sm:$0xff]
        %v677 = vld [vmem:[%s288 + $0x8] sm:$0xff]
        %v678 = vld [vmem:[%s288 + $0x10] sm:$0xff]
        %v679 = vld [vmem:[%s288 + $0x18] sm:$0xff]
        %v680 = vsel %vm340, %v676, 0.0
        %v681 = vsel %vm340, %v677, 0.0
        %v682 = vadd.f32 %v680, %v681
        %v683 = vsel %vm340, %v678, 0.0
        %v684 = vadd.f32 %v682, %v683
        %v685 = vsel %vm340, %v679, 0.0
        %v686 = vadd.f32 %v684, %v685
        %v687 = vrot.slane %v686, 4
        %v688 = vadd.f32 %v686, %v687
        %v689 = vrot.slane %v688, 2
        %v690 = vadd.f32 %v688, %v689
        %v691 = vrot.slane %v690, 1
        %v692 = vadd.f32 %v690, %v691
        %v693 = vrcp.pop 32.0
        %v694 = vmul.f32 %v692, %v693
        %v695 = vsel %vm340, %v676, -inf
        %v696 = vsel %vm340, %v677, -inf
        %v697 = vsel %vm340, %v678, -inf
        %v698 = vsel %vm340, %v679, -inf
        %v699 = vmax.f32 %v695, %v696
        %v700 = vmax.f32 %v697, %v698
        %v701 = vmax.f32 %v699, %v700
        %v702 = vrot.slane %v701, 4
        %v703 = vmax.f32 %v701, %v702
        %v704 = vrot.slane %v703, 2
        %v705 = vmax.f32 %v703, %v704
        %v706 = vrot.slane %v705, 1
        %v707 = vmax.f32 %v705, %v706
        %709 = vrot.lane.b32.xlu0 %v707, 64
        %v710 = vpop.permute.xlu0 %709
        %v712 = vsel %vm340, %v694, %v710
        %v713 = vpack.c.bf16 %v712, %v712
        %v714 = vld [vmem:[%s5] sm:$0xf]
        %v715 = vld [vmem:[%s5 + $0x4] sm:$0xf]
        %v716 = vld [vmem:[%s5 + $0x8] sm:$0xf]
        %v717 = vld [vmem:[%s5 + $0xc] sm:$0xf]
        %v718 = vld [vmem:[%s5 + $0x10] sm:$0xf]
        %v719 = vld [vmem:[%s5 + $0x14] sm:$0xf]
        %v720 = vld [vmem:[%s5 + $0x18] sm:$0xf]
        %v721 = vld [vmem:[%s5 + $0x1c] sm:$0xf]
        %v722 = vld [vmem:[%s5 + $0x20] sm:$0xf]
        %v723 = vld [vmem:[%s5 + $0x24] sm:$0xf]
        %v724 = vld [vmem:[%s5 + $0x28] sm:$0xf]
        %v725 = vld [vmem:[%s5 + $0x2c] sm:$0xf]
        %v726 = vld [vmem:[%s5 + $0x30] sm:$0xf]
        %v727 = vld [vmem:[%s5 + $0x34] sm:$0xf]
        %v728 = vld [vmem:[%s5 + $0x38] sm:$0xf]
        %v729 = vld [vmem:[%s5 + $0x3c] sm:$0xf]
        %v746 = vunpack.c.l.b16 %v714
        %v747 = vunpack.c.l.b16 %v715
        %v748 = vunpack.c.l.b16 %v716
        %v749 = vunpack.c.l.b16 %v717
        %v750 = vunpack.c.l.b16 %v718
        %v751 = vunpack.c.l.b16 %v719
        %v752 = vunpack.c.l.b16 %v720
        %v753 = vunpack.c.l.b16 %v721
        %v754 = vunpack.c.l.b16 %v722
        %v755 = vunpack.c.l.b16 %v723
        %v756 = vunpack.c.l.b16 %v724
        %v757 = vunpack.c.l.b16 %v725
        %v758 = vunpack.c.l.b16 %v726
        %v759 = vunpack.c.l.b16 %v727
        %v760 = vunpack.c.l.b16 %v728
        %v761 = vunpack.c.l.b16 %v729
        %v762 = vpack.c.b16 %v747, %v746
        %v763 = vpack.c.b16 %v749, %v748
        %v764 = vpack.c.b16 %v751, %v750
        %v765 = vpack.c.b16 %v753, %v752
        %v766 = vpack.c.b16 %v755, %v754
        %v767 = vpack.c.b16 %v757, %v756
        %v768 = vpack.c.b16 %v759, %v758
        %v769 = vpack.c.b16 %v761, %v760
        %778 = vmatprep.subr.bf16.mxu0 0
        %779 = vmatpush1.bf16.msra.mxu0 %v769
        %780 = vmatprep.subr.bf16.mxu0 0
        %781 = vmatpush1.bf16.msra.mxu0 %v768
        %782 = vmatprep.subr.bf16.mxu0 0
        %783 = vmatpush1.bf16.msra.mxu0 %v767
        %784 = vmatprep.subr.bf16.mxu0 0
        %785 = vmatpush1.bf16.msra.mxu0 %v766
        %786 = vmatprep.subr.bf16.mxu0 0
        %787 = vmatpush1.bf16.msra.mxu0 %v765
        %788 = vmatprep.subr.bf16.mxu0 0
        %789 = vmatpush1.bf16.msra.mxu0 %v764
        %790 = vmatprep.subr.bf16.mxu0 0
        %791 = vmatpush1.bf16.msra.mxu0 %v763
        %792 = vmatprep.subr.bf16.mxu0 0
        %793 = vmatpush1.bf16.msra.mxu0 %v762
        %794 = vmatprep.subr.bf16.mxu0 0
        %795 = vmatpush2.bf16.msra.mxu0 0
        %796 = vmatprep.subr.bf16.mxu0 0
        %797 = vmatpush2.bf16.msra.mxu0 0
        %798 = vmatprep.subr.bf16.mxu0 0
        %799 = vmatpush2.bf16.msra.mxu0 0
        %800 = vmatprep.subr.bf16.mxu0 0
        %801 = vmatpush2.bf16.msra.mxu0 0
        %802 = vmatprep.subr.bf16.mxu0 0
        %803 = vmatpush2.bf16.msra.mxu0 0
        %804 = vmatprep.subr.bf16.mxu0 0
        %805 = vmatpush2.bf16.msra.mxu0 0
        %806 = vmatprep.subr.bf16.mxu0 0
        %807 = vmatpush2.bf16.msra.mxu0 0
        %808 = vmatprep.subr.bf16.mxu0 0
        %809 = vmatpush2.bf16.msra.mxu0 0
        %810 = vmatprep.mubr.bf16.mxu0 0
        %811 = vmatmul.mubr.bf16.gmra.mxu0 %v713
        %v812 = vpop.f32.mrf.mxu0
        %v813 = vadd.f32 0.0, %v812
        %v814 = vpop.f32.mrf.mxu0
        %v815 = vpop.f32.mrf.mxu0
        %v816 = vpop.f32.mrf.mxu0
        %817 = vdwg.mxu0
        %v818 = vxor.u32 %v813, 2147483648
        %v819 = vmul.f32 %v818, 1.442695
        %v820 = vpow.pop %v819
        %v821 = vadd.f32 %v820, 1.0
        %v822 = vrcp.pop %v821
        %v823 = vmul.f32 1.0, %v822
        %v824 = vlaneseq
        %v825 = vshrl.u32 %v824, 7
        %v826 = vsub.s32 0, %v825
        %v827 = vrot.slane %v823, %v826
        %v828 = vmul.f32 %v676, %v827
        %v829 = vmul.f32 %v677, %v827
        %v830 = vmul.f32 %v678, %v827
        %v831 = vmul.f32 %v679, %v827
        %832 = vst.msk [vmem:[%s288] sm:$0xff] %vm340, %v828
        %833 = vst.msk [vmem:[%s288 + $0x8] sm:$0xff] %vm340, %v829
        %834 = vst.msk [vmem:[%s288 + $0x10] sm:$0xff] %vm340, %v830
        %835 = vst.msk [vmem:[%s288 + $0x18] sm:$0xff] %vm340, %v831
        %s836 = sand.u32 %s161, 1
        %s837 = scalar_lea.sflag [#allocation3], %s836
        %s838 = sand.u32 %s161, 1
        %s839 = scalar_lea.vmem [#allocation2], %s838
        %p840 = scmp.lt.s32.totalorder %s22, 1
        %s841 = scalar_select %p840, %s22, 1
        %s842 = smul.addr %s841, 4
        %s843 = smul.addr %s842, 8
        %s844 = scalar_lea.vmem %s7, %s843
        // Predicated region
        $region45: #{forward.2} parent=43 // pred_check
          %p845 = pneg %p171
        $region46: #{forward.2} parent=43 // pred_check_branch
          %847 = sbr.rel (%p845) target = $region48
        $region47: #{forward.2} parent=43 // pred_region
          %s849 = ssub.s32 16, 16
          %850 = vsyncadd %s837, %s849
          %s851 = smul.addr %s22, 16
          %s852 = scalar_lea.hbm %s6, %s851
          %s854 = sshll.u32 %s839, 4
          %s855 = int_to_ptr.vmem [resolvable:$true] %s854
          %857 = dma.vmem_to_hbm [thread:$0]  %s855, 16, %s852, %s837
        $region48: #{forward.2} parent=43 // pred_fallthru
          _
        // Predicated region
        $region49: #{forward.2} parent=43 // pred_check
          %p858 = pneg %p197
        $region50: #{forward.2} parent=43 // pred_check_branch
          %860 = sbr.rel (%p858) target = $region52
        $region51: #{forward.2} parent=43 // pred_region
          _
        $region52: #{forward.2} parent=43 // pred_fallthru
          _
      $region44: #{forward.2} parent=5 // pred_fallthru
        _
      %p861 = scmp.le.s32.totalorder 2, %s17
      // Predicated region
      $region53: #{forward.2} parent=5 // pred_check
        %p862 = pneg %p861
      $region54: #{forward.2} parent=5 // pred_check_branch
        %864 = sbr.rel (%p862) target = $region56
      $region55: #{forward.2} parent=5 // pred_region
        %s865 = ssub.s32 %s17, 2
        // Predicated region
        $region57: #{forward.2} parent=55 // pred_check
          %p866 = pneg %p177
        $region58: #{forward.2} parent=55 // pred_check_branch
          %868 = sbr.rel (%p866) target = $region60
        $region59: #{forward.2} parent=55 // pred_region
          %s869 = sand.u32 %s162, 1
          %s870 = scalar_lea.sflag [#allocation3], %s869
          %s871 = sand.u32 %s162, 1
          %s872 = scalar_lea.vmem [#allocation2], %s871
          %873 = dma.done %s870, 16
        $region60: #{forward.2} parent=55 // pred_fallthru
          _
        // Predicated region
        $region61: #{forward.2} parent=55 // pred_check
          %p874 = pneg %p203
        $region62: #{forward.2} parent=55 // pred_check_branch
          %876 = sbr.rel (%p874) target = $region64
        $region63: #{forward.2} parent=55 // pred_region
          %p877 = scmp.lt.s32.totalorder %s23, 1
          %s878 = scalar_select %p877, %s23, 1
          %s879 = smul.addr %s878, 4
          %s880 = smul.addr %s879, 8
          %s881 = scalar_lea.vmem %s7, %s880
        $region64: #{forward.2} parent=55 // pred_fallthru
          _
      $region56: #{forward.2} parent=5 // pred_fallthru
        _
    $region6: #{forward.2} parent=1 // loop_footer
      %s21 = sadd.s32 1, %s17
    $region7: #{forward.2} parent=1 // loop_footer_branch
      %16 = sbr.rel target = $region3
    $region8: #{forward.2} parent=1 // loop_exit
      _
    %882 = vsyncpa [#allocation3], 1
    %s883 = scalar_lea.sflag [#allocation3], 1
    %884 = vsyncpa %s883, 1

// kernel: forward.3
$region0: #{forward.3}
  #allocation0 [shape = 'u32[]', space=smem, size = 0x4, offset = 0x4, fixed_abs, tag = 'smem constant byte address 0x4 - core index']
  #allocation1 [shape = 'u32[144,128]{1,0:T(1,128)}', space=vmem, size = 0x12000, scoped, tag = 'internal scratch']
  %s0 = inlined_call_operand.vmem [shape: f32[2,32,8], index: 0, kind: input, shape index: {}]
  %s1 = inlined_call_operand.vmem [shape: bf16[8,8], index: 1, kind: input, shape index: {}]
  %s2 = inlined_call_operand.vmem [shape: bf16[32,32], index: 2, kind: input, shape index: {}]
  %s3 = inlined_call_operand.vmem [shape: f32[32,1], index: 3, kind: input, shape index: {}]
  %s4 = inlined_call_operand.vmem [shape: bf16[32,32], index: 4, kind: input, shape index: {}]
  %s5 = inlined_call_operand.vmem [shape: f32[32,1], index: 5, kind: input, shape index: {}]
  %s6 = inlined_call_operand.vmem [shape: f32[32,4], index: 6, kind: input, shape index: {}]
  %s7 = inlined_call_operand.vmem [shape: bf16[8,32], index: 7, kind: input, shape index: {}]
  %s8 = inlined_call_operand.vmem [shape: bf16[8,32], index: 8, kind: input, shape index: {}]
  %s9 = inlined_call_operand.vmem [shape: f32[8,1], index: 9, kind: input, shape index: {}]
  %s10 = inlined_call_operand.vmem [shape: bf16[32,32], index: 10, kind: input, shape index: {}]
  %s11 = inlined_call_operand.vmem [shape: f32[32,1], index: 11, kind: input, shape index: {}]
  %s12 = inlined_call_operand.vmem [shape: f32[8,8], index: 12, kind: input, shape index: {}]
  %s13 = inlined_call_operand.vmem [shape: f32[32,8], index: 13, kind: input, shape index: {}]
  %s14 = inlined_call_operand.vmem [shape: f32[1,8], index: 14, kind: input, shape index: {}]
  %s15 = inlined_call_operand.hbm [shape: f32[2,1,8], index: 15, kind: output, shape index: {}]
  %s16 = sld [smem:[#allocation0]]
  $region93: #{forward.3} parent=0
    _
  %s18 = ssub.s32 1, %s16
  %s19 = scalar_select 0, %s18, %s16
  $region1: #{forward.3} parent=0
    #allocation2 [shape = 'u8[1024]{0}', space=vmem, size = 0x400, scoped, tag = 'output window, operand 0']
    #allocation3 [shape = 's32[2]{0}', space=sflag, size = 0x8, scoped, tag = 'scoped memory for forward.3']
    %20 = vsyncpa [#allocation3], 0
    %s21 = scalar_lea.sflag [#allocation3], 1
    %22 = vsyncpa %s21, 0
    loop: start=0, step=1, limit=4
    $region2: #{forward.3} parent=1 // loop_pre_header
      _
    $region3: #{forward.3} parent=1 // loop_header
      %s24 = sphi 0, %s28
      %p25 = scmp.ge.s32.totalorder %s24, 4
      %s34 = sphi 0, %s36
      %s37 = sphi 0, %s34
      %s38 = sphi 0, %s37
      %s54 = sphi 0, %s38
      %s58 = sphi 0, %s58
      %s60 = sphi 0, %s58
      %s61 = sphi 0, %s60
      %s75 = sphi 0, %s61
      %s79 = sphi 0, %s79
      %s81 = sphi 0, %s79
      %s82 = sphi 0, %s81
      %s96 = sphi 0, %s82
      %s100 = sphi 0, %s100
      %s102 = sphi 0, %s100
      %s103 = sphi 0, %s102
      %s117 = sphi 0, %s103
      %s121 = sphi 0, %s121
      %s123 = sphi 0, %s121
      %s124 = sphi 0, %s123
      %s138 = sphi 0, %s124
      %s142 = sphi 0, %s142
      %s144 = sphi 0, %s142
      %s145 = sphi 0, %s144
      %s159 = sphi 0, %s145
      %s163 = sphi 0, %s163
      %s165 = sphi 0, %s163
      %s166 = sphi 0, %s165
      %s180 = sphi 0, %s166
      %s184 = sphi 0, %s184
      %s186 = sphi 0, %s184
      %s187 = sphi 0, %s186
      %s201 = sphi 0, %s187
      %s205 = sphi 0, %s205
      %s207 = sphi 0, %s205
      %s208 = sphi 0, %s207
      %s222 = sphi 0, %s208
      %s226 = sphi 0, %s226
      %s228 = sphi 0, %s226
      %s229 = sphi 0, %s228
      %s243 = sphi 0, %s229
      %s247 = sphi 0, %s247
      %s249 = sphi 0, %s247
      %s250 = sphi 0, %s249
      %s264 = sphi 0, %s250
      %s268 = sphi 0, %s268
      %s270 = sphi 0, %s268
      %s271 = sphi 0, %s270
      %s285 = sphi 0, %s271
      %s289 = sphi 0, %s289
      %s291 = sphi 0, %s289
      %s292 = sphi 0, %s291
      %s306 = sphi 0, %s292
      %s310 = sphi 0, %s310
      %s312 = sphi 0, %s310
      %s313 = sphi 0, %s312
      %s327 = sphi 0, %s313
      %s331 = sphi 0, %s331
      %s333 = sphi 0, %s331
      %s334 = sphi 0, %s333
      %s348 = sphi 0, %s334
      %s354 = sphi 0, %s356
      %s357 = sphi 0, %s354
      %s358 = sphi 0, %s357
      %s374 = sphi 0, %s358
    $region4: #{forward.3} parent=1 // loop_header_branch
      %27 = sbr.rel (%p25) target = $region8
    $region5: #{forward.3} parent=1 // loop_body
      %s29 = ssub.s32 %s24, 1
      %s30 = ssub.s32 %s24, 2
      %s31 = sadd.s32 %s24, 1
      %s32 = ssub.s32 %s24, %s31
      %p33 = scmp.eq.s32.totalorder %s32, 0
      %s35 = sadd.s32 %s34, 1
      %s36 = scalar_select %p33, %s34, %s35
      %p39 = pneg %p33
      %p40 = scmp.eq.s32.totalorder %s24, 1
      %p41 = por %p39, %p40
      %p42 = scmp.ne.s32.totalorder %s34, %s37
      %p43 = scmp.eq.s32.totalorder %s24, 0
      %p44 = por %p42, %p43
      %p45 = scmp.ne.s32.totalorder %s34, %s37
      %p46 = scmp.eq.s32.totalorder %s29, 1
      %p47 = por %p45, %p46
      %p48 = scmp.ne.s32.totalorder %s37, %s38
      %p49 = scmp.eq.s32.totalorder %s29, 0
      %p50 = por %p48, %p49
      %p51 = scmp.ne.s32.totalorder %s37, %s38
      %p52 = scmp.eq.s32.totalorder %s30, 1
      %p53 = por %p51, %p52
      %p55 = scmp.ne.s32.totalorder %s38, %s54
      %p56 = scmp.eq.s32.totalorder %s30, 0
      %p57 = por %p55, %p56
      %s59 = sadd.s32 %s58, 1
      %p62 = scmp.eq.s32.totalorder %s24, 1
      %p63 = scmp.ne.s32.totalorder %s58, %s60
      %p64 = scmp.eq.s32.totalorder %s24, 0
      %p65 = por %p63, %p64
      %p66 = scmp.ne.s32.totalorder %s58, %s60
      %p67 = scmp.eq.s32.totalorder %s29, 1
      %p68 = por %p66, %p67
      %p69 = scmp.ne.s32.totalorder %s60, %s61
      %p70 = scmp.eq.s32.totalorder %s29, 0
      %p71 = por %p69, %p70
      %p72 = scmp.ne.s32.totalorder %s60, %s61
      %p73 = scmp.eq.s32.totalorder %s30, 1
      %p74 = por %p72, %p73
      %p76 = scmp.ne.s32.totalorder %s61, %s75
      %p77 = scmp.eq.s32.totalorder %s30, 0
      %p78 = por %p76, %p77
      %s80 = sadd.s32 %s79, 1
      %p83 = scmp.eq.s32.totalorder %s24, 1
      %p84 = scmp.ne.s32.totalorder %s79, %s81
      %p85 = scmp.eq.s32.totalorder %s24, 0
      %p86 = por %p84, %p85
      %p87 = scmp.ne.s32.totalorder %s79, %s81
      %p88 = scmp.eq.s32.totalorder %s29, 1
      %p89 = por %p87, %p88
      %p90 = scmp.ne.s32.totalorder %s81, %s82
      %p91 = scmp.eq.s32.totalorder %s29, 0
      %p92 = por %p90, %p91
      %p93 = scmp.ne.s32.totalorder %s81, %s82
      %p94 = scmp.eq.s32.totalorder %s30, 1
      %p95 = por %p93, %p94
      %p97 = scmp.ne.s32.totalorder %s82, %s96
      %p98 = scmp.eq.s32.totalorder %s30, 0
      %p99 = por %p97, %p98
      %s101 = sadd.s32 %s100, 1
      %p104 = scmp.eq.s32.totalorder %s24, 1
      %p105 = scmp.ne.s32.totalorder %s100, %s102
      %p106 = scmp.eq.s32.totalorder %s24, 0
      %p107 = por %p105, %p106
      %p108 = scmp.ne.s32.totalorder %s100, %s102
      %p109 = scmp.eq.s32.totalorder %s29, 1
      %p110 = por %p108, %p109
      %p111 = scmp.ne.s32.totalorder %s102, %s103
      %p112 = scmp.eq.s32.totalorder %s29, 0
      %p113 = por %p111, %p112
      %p114 = scmp.ne.s32.totalorder %s102, %s103
      %p115 = scmp.eq.s32.totalorder %s30, 1
      %p116 = por %p114, %p115
      %p118 = scmp.ne.s32.totalorder %s103, %s117
      %p119 = scmp.eq.s32.totalorder %s30, 0
      %p120 = por %p118, %p119
      %s122 = sadd.s32 %s121, 1
      %p125 = scmp.eq.s32.totalorder %s24, 1
      %p126 = scmp.ne.s32.totalorder %s121, %s123
      %p127 = scmp.eq.s32.totalorder %s24, 0
      %p128 = por %p126, %p127
      %p129 = scmp.ne.s32.totalorder %s121, %s123
      %p130 = scmp.eq.s32.totalorder %s29, 1
      %p131 = por %p129, %p130
      %p132 = scmp.ne.s32.totalorder %s123, %s124
      %p133 = scmp.eq.s32.totalorder %s29, 0
      %p134 = por %p132, %p133
      %p135 = scmp.ne.s32.totalorder %s123, %s124
      %p136 = scmp.eq.s32.totalorder %s30, 1
      %p137 = por %p135, %p136
      %p139 = scmp.ne.s32.totalorder %s124, %s138
      %p140 = scmp.eq.s32.totalorder %s30, 0
      %p141 = por %p139, %p140
      %s143 = sadd.s32 %s142, 1
      %p146 = scmp.eq.s32.totalorder %s24, 1
      %p147 = scmp.ne.s32.totalorder %s142, %s144
      %p148 = scmp.eq.s32.totalorder %s24, 0
      %p149 = por %p147, %p148
      %p150 = scmp.ne.s32.totalorder %s142, %s144
      %p151 = scmp.eq.s32.totalorder %s29, 1
      %p152 = por %p150, %p151
      %p153 = scmp.ne.s32.totalorder %s144, %s145
      %p154 = scmp.eq.s32.totalorder %s29, 0
      %p155 = por %p153, %p154
      %p156 = scmp.ne.s32.totalorder %s144, %s145
      %p157 = scmp.eq.s32.totalorder %s30, 1
      %p158 = por %p156, %p157
      %p160 = scmp.ne.s32.totalorder %s145, %s159
      %p161 = scmp.eq.s32.totalorder %s30, 0
      %p162 = por %p160, %p161
      %s164 = sadd.s32 %s163, 1
      %p167 = scmp.eq.s32.totalorder %s24, 1
      %p168 = scmp.ne.s32.totalorder %s163, %s165
      %p169 = scmp.eq.s32.totalorder %s24, 0
      %p170 = por %p168, %p169
      %p171 = scmp.ne.s32.totalorder %s163, %s165
      %p172 = scmp.eq.s32.totalorder %s29, 1
      %p173 = por %p171, %p172
      %p174 = scmp.ne.s32.totalorder %s165, %s166
      %p175 = scmp.eq.s32.totalorder %s29, 0
      %p176 = por %p174, %p175
      %p177 = scmp.ne.s32.totalorder %s165, %s166
      %p178 = scmp.eq.s32.totalorder %s30, 1
      %p179 = por %p177, %p178
      %p181 = scmp.ne.s32.totalorder %s166, %s180
      %p182 = scmp.eq.s32.totalorder %s30, 0
      %p183 = por %p181, %p182
      %s185 = sadd.s32 %s184, 1
      %p188 = scmp.eq.s32.totalorder %s24, 1
      %p189 = scmp.ne.s32.totalorder %s184, %s186
      %p190 = scmp.eq.s32.totalorder %s24, 0
      %p191 = por %p189, %p190
      %p192 = scmp.ne.s32.totalorder %s184, %s186
      %p193 = scmp.eq.s32.totalorder %s29, 1
      %p194 = por %p192, %p193
      %p195 = scmp.ne.s32.totalorder %s186, %s187
      %p196 = scmp.eq.s32.totalorder %s29, 0
      %p197 = por %p195, %p196
      %p198 = scmp.ne.s32.totalorder %s186, %s187
      %p199 = scmp.eq.s32.totalorder %s30, 1
      %p200 = por %p198, %p199
      %p202 = scmp.ne.s32.totalorder %s187, %s201
      %p203 = scmp.eq.s32.totalorder %s30, 0
      %p204 = por %p202, %p203
      %s206 = sadd.s32 %s205, 1
      %p209 = scmp.eq.s32.totalorder %s24, 1
      %p210 = scmp.ne.s32.totalorder %s205, %s207
      %p211 = scmp.eq.s32.totalorder %s24, 0
      %p212 = por %p210, %p211
      %p213 = scmp.ne.s32.totalorder %s205, %s207
      %p214 = scmp.eq.s32.totalorder %s29, 1
      %p215 = por %p213, %p214
      %p216 = scmp.ne.s32.totalorder %s207, %s208
      %p217 = scmp.eq.s32.totalorder %s29, 0
      %p218 = por %p216, %p217
      %p219 = scmp.ne.s32.totalorder %s207, %s208
      %p220 = scmp.eq.s32.totalorder %s30, 1
      %p221 = por %p219, %p220
      %p223 = scmp.ne.s32.totalorder %s208, %s222
      %p224 = scmp.eq.s32.totalorder %s30, 0
      %p225 = por %p223, %p224
      %s227 = sadd.s32 %s226, 1
      %p230 = scmp.eq.s32.totalorder %s24, 1
      %p231 = scmp.ne.s32.totalorder %s226, %s228
      %p232 = scmp.eq.s32.totalorder %s24, 0
      %p233 = por %p231, %p232
      %p234 = scmp.ne.s32.totalorder %s226, %s228
      %p235 = scmp.eq.s32.totalorder %s29, 1
      %p236 = por %p234, %p235
      %p237 = scmp.ne.s32.totalorder %s228, %s229
      %p238 = scmp.eq.s32.totalorder %s29, 0
      %p239 = por %p237, %p238
      %p240 = scmp.ne.s32.totalorder %s228, %s229
      %p241 = scmp.eq.s32.totalorder %s30, 1
      %p242 = por %p240, %p241
      %p244 = scmp.ne.s32.totalorder %s229, %s243
      %p245 = scmp.eq.s32.totalorder %s30, 0
      %p246 = por %p244, %p245
      %s248 = sadd.s32 %s247, 1
      %p251 = scmp.eq.s32.totalorder %s24, 1
      %p252 = scmp.ne.s32.totalorder %s247, %s249
      %p253 = scmp.eq.s32.totalorder %s24, 0
      %p254 = por %p252, %p253
      %p255 = scmp.ne.s32.totalorder %s247, %s249
      %p256 = scmp.eq.s32.totalorder %s29, 1
      %p257 = por %p255, %p256
      %p258 = scmp.ne.s32.totalorder %s249, %s250
      %p259 = scmp.eq.s32.totalorder %s29, 0
      %p260 = por %p258, %p259
      %p261 = scmp.ne.s32.totalorder %s249, %s250
      %p262 = scmp.eq.s32.totalorder %s30, 1
      %p263 = por %p261, %p262
      %p265 = scmp.ne.s32.totalorder %s250, %s264
      %p266 = scmp.eq.s32.totalorder %s30, 0
      %p267 = por %p265, %p266
      %s269 = sadd.s32 %s268, 1
      %p272 = scmp.eq.s32.totalorder %s24, 1
      %p273 = scmp.ne.s32.totalorder %s268, %s270
      %p274 = scmp.eq.s32.totalorder %s24, 0
      %p275 = por %p273, %p274
      %p276 = scmp.ne.s32.totalorder %s268, %s270
      %p277 = scmp.eq.s32.totalorder %s29, 1
      %p278 = por %p276, %p277
      %p279 = scmp.ne.s32.totalorder %s270, %s271
      %p280 = scmp.eq.s32.totalorder %s29, 0
      %p281 = por %p279, %p280
      %p282 = scmp.ne.s32.totalorder %s270, %s271
      %p283 = scmp.eq.s32.totalorder %s30, 1
      %p284 = por %p282, %p283
      %p286 = scmp.ne.s32.totalorder %s271, %s285
      %p287 = scmp.eq.s32.totalorder %s30, 0
      %p288 = por %p286, %p287
      %s290 = sadd.s32 %s289, 1
      %p293 = scmp.eq.s32.totalorder %s24, 1
      %p294 = scmp.ne.s32.totalorder %s289, %s291
      %p295 = scmp.eq.s32.totalorder %s24, 0
      %p296 = por %p294, %p295
      %p297 = scmp.ne.s32.totalorder %s289, %s291
      %p298 = scmp.eq.s32.totalorder %s29, 1
      %p299 = por %p297, %p298
      %p300 = scmp.ne.s32.totalorder %s291, %s292
      %p301 = scmp.eq.s32.totalorder %s29, 0
      %p302 = por %p300, %p301
      %p303 = scmp.ne.s32.totalorder %s291, %s292
      %p304 = scmp.eq.s32.totalorder %s30, 1
      %p305 = por %p303, %p304
      %p307 = scmp.ne.s32.totalorder %s292, %s306
      %p308 = scmp.eq.s32.totalorder %s30, 0
      %p309 = por %p307, %p308
      %s311 = sadd.s32 %s310, 1
      %p314 = scmp.eq.s32.totalorder %s24, 1
      %p315 = scmp.ne.s32.totalorder %s310, %s312
      %p316 = scmp.eq.s32.totalorder %s24, 0
      %p317 = por %p315, %p316
      %p318 = scmp.ne.s32.totalorder %s310, %s312
      %p319 = scmp.eq.s32.totalorder %s29, 1
      %p320 = por %p318, %p319
      %p321 = scmp.ne.s32.totalorder %s312, %s313
      %p322 = scmp.eq.s32.totalorder %s29, 0
      %p323 = por %p321, %p322
      %p324 = scmp.ne.s32.totalorder %s312, %s313
      %p325 = scmp.eq.s32.totalorder %s30, 1
      %p326 = por %p324, %p325
      %p328 = scmp.ne.s32.totalorder %s313, %s327
      %p329 = scmp.eq.s32.totalorder %s30, 0
      %p330 = por %p328, %p329
      %s332 = sadd.s32 %s331, 1
      %p335 = scmp.eq.s32.totalorder %s24, 1
      %p336 = scmp.ne.s32.totalorder %s331, %s333
      %p337 = scmp.eq.s32.totalorder %s24, 0
      %p338 = por %p336, %p337
      %p339 = scmp.ne.s32.totalorder %s331, %s333
      %p340 = scmp.eq.s32.totalorder %s29, 1
      %p341 = por %p339, %p340
      %p342 = scmp.ne.s32.totalorder %s333, %s334
      %p343 = scmp.eq.s32.totalorder %s29, 0
      %p344 = por %p342, %p343
      %p345 = scmp.ne.s32.totalorder %s333, %s334
      %p346 = scmp.eq.s32.totalorder %s30, 1
      %p347 = por %p345, %p346
      %p349 = scmp.ne.s32.totalorder %s334, %s348
      %p350 = scmp.eq.s32.totalorder %s30, 0
      %p351 = por %p349, %p350
      %s352 = ssub.s32 %s24, %s31
      %p353 = scmp.eq.s32.totalorder %s352, 0
      %s355 = sadd.s32 %s354, 1
      %s356 = scalar_select %p353, %s354, %s355
      %p359 = pneg %p353
      %p360 = scmp.eq.s32.totalorder %s24, 1
      %p361 = por %p359, %p360
      %p362 = scmp.ne.s32.totalorder %s354, %s357
      %p363 = scmp.eq.s32.totalorder %s24, 0
      %p364 = por %p362, %p363
      %p365 = scmp.ne.s32.totalorder %s354, %s357
      %p366 = scmp.eq.s32.totalorder %s29, 1
      %p367 = por %p365, %p366
      %p368 = scmp.ne.s32.totalorder %s357, %s358
      %p369 = scmp.eq.s32.totalorder %s29, 0
      %p370 = por %p368, %p369
      %p371 = scmp.ne.s32.totalorder %s357, %s358
      %p372 = scmp.eq.s32.totalorder %s30, 1
      %p373 = por %p371, %p372
      %p375 = scmp.ne.s32.totalorder %s358, %s374
      %p376 = scmp.eq.s32.totalorder %s30, 0
      %p377 = por %p375, %p376
      %p378 = scmp.le.s32.totalorder 1, %s24
      %p379 = scmp.lt.s32.totalorder %s24, 3
      %p380 = pnand %p378, %p379
      %p381 = pneg %p380
      // Predicated region
      $region9: #{forward.3} parent=5 // pred_check
        _
      $region10: #{forward.3} parent=5 // pred_check_branch
        %383 = sbr.rel (%p380) target = $region12
      $region11: #{forward.3} parent=5 // pred_region
        %s384 = ssub.s32 %s24, 1
        // Predicated region
        $region13: #{forward.3} parent=11 // pred_check
          %p385 = pneg %p71
        $region14: #{forward.3} parent=11 // pred_check_branch
          %387 = sbr.rel (%p385) target = $region16
        $region15: #{forward.3} parent=11 // pred_region
          _
        $region16: #{forward.3} parent=11 // pred_fallthru
          _
        // Predicated region
        $region17: #{forward.3} parent=11 // pred_check
          %p388 = pneg %p92
        $region18: #{forward.3} parent=11 // pred_check_branch
          %390 = sbr.rel (%p388) target = $region20
        $region19: #{forward.3} parent=11 // pred_region
          _
        $region20: #{forward.3} parent=11 // pred_fallthru
          _
        // Predicated region
        $region21: #{forward.3} parent=11 // pred_check
          %p391 = pneg %p113
        $region22: #{forward.3} parent=11 // pred_check_branch
          %393 = sbr.rel (%p391) target = $region24
        $region23: #{forward.3} parent=11 // pred_region
          _
        $region24: #{forward.3} parent=11 // pred_fallthru
          _
        // Predicated region
        $region25: #{forward.3} parent=11 // pred_check
          %p394 = pneg %p134
        $region26: #{forward.3} parent=11 // pred_check_branch
          %396 = sbr.rel (%p394) target = $region28
        $region27: #{forward.3} parent=11 // pred_region
          _
        $region28: #{forward.3} parent=11 // pred_fallthru
          _
        // Predicated region
        $region29: #{forward.3} parent=11 // pred_check
          %p397 = pneg %p155
        $region30: #{forward.3} parent=11 // pred_check_branch
          %399 = sbr.rel (%p397) target = $region32
        $region31: #{forward.3} parent=11 // pred_region
          _
        $region32: #{forward.3} parent=11 // pred_fallthru
          _
        // Predicated region
        $region33: #{forward.3} parent=11 // pred_check
          %p400 = pneg %p176
        $region34: #{forward.3} parent=11 // pred_check_branch
          %402 = sbr.rel (%p400) target = $region36
        $region35: #{forward.3} parent=11 // pred_region
          _
        $region36: #{forward.3} parent=11 // pred_fallthru
          _
        // Predicated region
        $region37: #{forward.3} parent=11 // pred_check
          %p403 = pneg %p197
        $region38: #{forward.3} parent=11 // pred_check_branch
          %405 = sbr.rel (%p403) target = $region40
        $region39: #{forward.3} parent=11 // pred_region
          _
        $region40: #{forward.3} parent=11 // pred_fallthru
          _
        // Predicated region
        $region41: #{forward.3} parent=11 // pred_check
          %p406 = pneg %p218
        $region42: #{forward.3} parent=11 // pred_check_branch
          %408 = sbr.rel (%p406) target = $region44
        $region43: #{forward.3} parent=11 // pred_region
          _
        $region44: #{forward.3} parent=11 // pred_fallthru
          _
        // Predicated region
        $region45: #{forward.3} parent=11 // pred_check
          %p409 = pneg %p239
        $region46: #{forward.3} parent=11 // pred_check_branch
          %411 = sbr.rel (%p409) target = $region48
        $region47: #{forward.3} parent=11 // pred_region
          _
        $region48: #{forward.3} parent=11 // pred_fallthru
          _
        // Predicated region
        $region49: #{forward.3} parent=11 // pred_check
          %p412 = pneg %p260
        $region50: #{forward.3} parent=11 // pred_check_branch
          %414 = sbr.rel (%p412) target = $region52
        $region51: #{forward.3} parent=11 // pred_region
          _
        $region52: #{forward.3} parent=11 // pred_fallthru
          _
        // Predicated region
        $region53: #{forward.3} parent=11 // pred_check
          %p415 = pneg %p281
        $region54: #{forward.3} parent=11 // pred_check_branch
          %417 = sbr.rel (%p415) target = $region56
        $region55: #{forward.3} parent=11 // pred_region
          _
        $region56: #{forward.3} parent=11 // pred_fallthru
          _
        // Predicated region
        $region57: #{forward.3} parent=11 // pred_check
          %p418 = pneg %p302
        $region58: #{forward.3} parent=11 // pred_check_branch
          %420 = sbr.rel (%p418) target = $region60
        $region59: #{forward.3} parent=11 // pred_region
          _
        $region60: #{forward.3} parent=11 // pred_fallthru
          _
        // Predicated region
        $region61: #{forward.3} parent=11 // pred_check
          %p421 = pneg %p323
        $region62: #{forward.3} parent=11 // pred_check_branch
          %423 = sbr.rel (%p421) target = $region64
        $region63: #{forward.3} parent=11 // pred_region
          _
        $region64: #{forward.3} parent=11 // pred_fallthru
          _
        // Predicated region
        $region65: #{forward.3} parent=11 // pred_check
          %p424 = pneg %p344
        $region66: #{forward.3} parent=11 // pred_check_branch
          %426 = sbr.rel (%p424) target = $region68
        $region67: #{forward.3} parent=11 // pred_region
          _
        $region68: #{forward.3} parent=11 // pred_fallthru
          _
      $region12: #{forward.3} parent=5 // pred_fallthru
        _
      %p427 = scmp.lt.s32.totalorder %s24, 2
      // Predicated region
      $region69: #{forward.3} parent=5 // pred_check
        %p428 = pneg %p427
      $region70: #{forward.3} parent=5 // pred_check_branch
        %430 = sbr.rel (%p428) target = $region72
      $region71: #{forward.3} parent=5 // pred_region
        // Predicated region
        $region73: #{forward.3} parent=71 // pred_check
          %p431 = pneg %p44
        $region74: #{forward.3} parent=71 // pred_check_branch
          %433 = sbr.rel (%p431) target = $region76
        $region75: #{forward.3} parent=71 // pred_region
          %p434 = scmp.lt.s32.totalorder %s24, 1
          %s435 = scalar_select %p434, %s24, 1
          %s436 = smul.addr %s435, 4
          %s437 = smul.addr %s436, 8
          %s438 = scalar_lea.vmem %s0, %s437
        $region76: #{forward.3} parent=71 // pred_fallthru
          _
      $region72: #{forward.3} parent=5 // pred_fallthru
        _
      %p439 = scmp.le.s32.totalorder 1, %s24
      %p440 = scmp.lt.s32.totalorder %s24, 3
      %p441 = pnand %p439, %p440
      %p442 = pneg %p441
      // Predicated region
      $region77: #{forward.3} parent=5 // pred_check
        _
      $region78: #{forward.3} parent=5 // pred_check_branch
        %444 = sbr.rel (%p441) target = $region80
      $region79: #{forward.3} parent=5 // pred_region
        %s445 = ssub.s32 %s24, 1
        %p446 = scmp.lt.s32.totalorder %s29, 1
        %s447 = scalar_select %p446, %s29, 1
        %s448 = smul.addr %s447, 4
        %s449 = smul.addr %s448, 8
        %s450 = scalar_lea.vmem %s0, %s449
        %p451 = pneg %p50
        %p452 = pneg %p47
        %p453 = pneg %p71
        %p454 = pneg %p68
        %p455 = pneg %p92
        %p456 = pneg %p89
        %p457 = pneg %p113
        %p458 = pneg %p110
        %p459 = pneg %p134
        %p460 = pneg %p131
        %p461 = pneg %p155
        %p462 = pneg %p152
        %p463 = pneg %p176
        %p464 = pneg %p173
        %p465 = pneg %p197
        %p466 = pneg %p194
        %p467 = pneg %p218
        %p468 = pneg %p215
        %p469 = pneg %p239
        %p470 = pneg %p236
        %p471 = pneg %p260
        %p472 = pneg %p257
        %p473 = pneg %p281
        %p474 = pneg %p278
        %p475 = pneg %p302
        %p476 = pneg %p299
        %p477 = pneg %p323
        %p478 = pneg %p320
        %p479 = pneg %p344
        %p480 = pneg %p341
        %p481 = pneg %p370
        %p482 = pneg %p367
        %s483 = sand.u32 %s357, 1
        %s484 = scalar_lea.sflag [#allocation3], %s483
        %s485 = sand.u32 %s357, 1
        %s486 = scalar_lea.vmem [#allocation2], %s485
        %p487 = scmp.lt.s32.totalorder %s29, 1
        %s488 = scalar_select %p487, %s29, 1
        %s489 = smul.addr %s488, 4
        %s490 = smul.addr %s489, 8
        %s491 = scalar_lea.vmem %s0, %s490
        %v493 = vld [vmem:[%s491] sm:$0xff]
        %v494 = vld [vmem:[%s491 + $0x8] sm:$0xff]
        %v495 = vld [vmem:[%s491 + $0x10] sm:$0xff]
        %v496 = vld [vmem:[%s491 + $0x18] sm:$0xff]
        %v497 = vpack.c.bf16 %v494, %v493
        %v498 = vpack.c.bf16 %v496, %v495
        %v499 = vld [vmem:[%s1] sm:$0xf]
        %vm500 = vcmask 64512
        %v502 = vsel %vm500, %v497, 0
        %v505 = vsel %vm500, %v498, 0
        %vm507 = vcmask 1043456
        %v509 = vsel %vm507, %v499, 0
        %511 = vmatprep.subr.bf16.mxu0 0
        %512 = vmatpush1.bf16.msra.mxu0 0
        %513 = vmatprep.subr.bf16.mxu0 0
        %514 = vmatpush1.bf16.msra.mxu0 0
        %515 = vmatprep.subr.bf16.mxu0 0
        %516 = vmatpush1.bf16.msra.mxu0 0
        %517 = vmatprep.subr.bf16.mxu0 0
        %518 = vmatpush1.bf16.msra.mxu0 0
        %519 = vmatprep.subr.bf16.mxu0 0
        %520 = vmatpush1.bf16.msra.mxu0 0
        %521 = vmatprep.subr.bf16.mxu0 0
        %522 = vmatpush1.bf16.msra.mxu0 0
        %523 = vmatprep.subr.bf16.mxu0 0
        %524 = vmatpush1.bf16.msra.mxu0 0
        %525 = vmatprep.subr.bf16.mxu0 0
        %526 = vmatpush1.bf16.msra.mxu0 %v509
        %527 = vmatprep.subr.bf16.mxu0 0
        %528 = vmatpush2.bf16.msra.mxu0 0
        %529 = vmatprep.subr.bf16.mxu0 0
        %530 = vmatpush2.bf16.msra.mxu0 0
        %531 = vmatprep.subr.bf16.mxu0 0
        %532 = vmatpush2.bf16.msra.mxu0 0
        %533 = vmatprep.subr.bf16.mxu0 0
        %534 = vmatpush2.bf16.msra.mxu0 0
        %535 = vmatprep.subr.bf16.mxu0 0
        %536 = vmatpush2.bf16.msra.mxu0 0
        %537 = vmatprep.subr.bf16.mxu0 0
        %538 = vmatpush2.bf16.msra.mxu0 0
        %539 = vmatprep.subr.bf16.mxu0 0
        %540 = vmatpush2.bf16.msra.mxu0 0
        %541 = vmatprep.subr.bf16.mxu0 0
        %542 = vmatpush2.bf16.msra.mxu0 0
        %543 = vmatprep.mubr.bf16.mxu0 0
        %544 = vmatmul.mubr.bf16.gmra.mxu0 %v502
        %v545 = vpop.f32.mrf.mxu0
        %v546 = vadd.f32 0.0, %v545
        %v547 = vpop.f32.mrf.mxu0
        %v548 = vpop.f32.mrf.mxu0
        %v549 = vadd.f32 0.0, %v548
        %v550 = vpop.f32.mrf.mxu0
        %551 = vmatprep.mubr.bf16.mxu0 0
        %552 = vmatmul.mubr.bf16.gmra.mxu0 %v505
        %v553 = vpop.f32.mrf.mxu0
        %v554 = vadd.f32 0.0, %v553
        %v555 = vpop.f32.mrf.mxu0
        %v556 = vpop.f32.mrf.mxu0
        %v557 = vadd.f32 0.0, %v556
        %v558 = vpop.f32.mrf.mxu0
        %559 = vdwg.mxu0
        %vm560 = vcmp.ge.f32.partialorder %v546, 0.0
        %vm561 = vcmp.ge.f32.partialorder %v549, 0.0
        %vm562 = vcmp.ge.f32.partialorder %v554, 0.0
        %vm563 = vcmp.ge.f32.partialorder %v557, 0.0
        %v564 = vmul.f32 %v546, 0.2
        %v565 = vmul.f32 %v549, 0.2
        %v566 = vmul.f32 %v554, 0.2
        %v567 = vmul.f32 %v557, 0.2
        %v568 = vsel %vm560, %v546, %v564
        %v569 = vsel %vm561, %v549, %v565
        %v570 = vsel %vm562, %v554, %v566
        %v571 = vsel %vm563, %v557, %v567
        %v572 = vld [vmem:[%s2] sm:$0xf]
        %v573 = vld [vmem:[%s2 + $0x4] sm:$0xf]
        %v574 = vld [vmem:[%s2 + $0x8] sm:$0xf]
        %v575 = vld [vmem:[%s2 + $0xc] sm:$0xf]
        %v576 = vpack.c.bf16 %v569, %v568
        %v577 = vpack.c.bf16 %v571, %v570
        %v578 = vld [vmem:[%s3] sm:$0xff]
        %v579 = vld [vmem:[%s3 + $0x8] sm:$0xff]
        %v580 = vld [vmem:[%s3 + $0x10] sm:$0xff]
        %v581 = vld [vmem:[%s3 + $0x18] sm:$0xff]
        %583 = vset.pattern.permute.xlu0 0
        %584 = vperm.xlu0 %583, %v578
        %v585 = vpop.permute.xlu0 %584
        %588 = vset.pattern.permute.xlu0 0
        %589 = vperm.xlu0 %588, %v579
        %v590 = vpop.permute.xlu0 %589
        %593 = vset.pattern.permute.xlu0 0
        %594 = vperm.xlu0 %593, %v580
        %v595 = vpop.permute.xlu0 %594
        %598 = vset.pattern.permute.xlu0 0
        %599 = vperm.xlu0 %598, %v581
        %v600 = vpop.permute.xlu0 %599
        %v606 = vunpack.c.l.b16 %v572
        %v607 = vunpack.c.l.b16 %v573
        %v608 = vunpack.c.l.b16 %v574
        %v609 = vunpack.c.l.b16 %v575
        %v610 = vpack.c.b16 %v607, %v606
        %v611 = vpack.c.b16 %v609, %v608
        %vm612 = vcmask 261120
        %v614 = vsel %vm612, %v610, 0
        %v617 = vsel %vm612, %v611, 0
        %619 = vmatprep.subr.bf16.mxu0 0
        %620 = vmatpush1.bf16.msra.mxu0 0
        %621 = vmatprep.subr.bf16.mxu0 0
        %622 = vmatpush1.bf16.msra.mxu0 0
        %623 = vmatprep.subr.bf16.mxu0 0
        %624 = vmatpush1.bf16.msra.mxu0 0
        %625 = vmatprep.subr.bf16.mxu0 0
        %626 = vmatpush1.bf16.msra.mxu0 0
        %627 = vmatprep.subr.bf16.mxu0 0
        %628 = vmatpush1.bf16.msra.mxu0 0
        %629 = vmatprep.subr.bf16.mxu0 0
        %630 = vmatpush1.bf16.msra.mxu0 0
        %631 = vmatprep.subr.bf16.mxu0 0
        %632 = vmatpush1.bf16.msra.mxu0 %v577
        %633 = vmatprep.subr.bf16.mxu0 0
        %634 = vmatpush1.bf16.msra.mxu0 %v576
        %635 = vmatprep.subr.bf16.mxu0 0
        %636 = vmatpush2.bf16.msra.mxu0 0
        %637 = vmatprep.subr.bf16.mxu0 0
        %638 = vmatpush2.bf16.msra.mxu0 0
        %639 = vmatprep.subr.bf16.mxu0 0
        %640 = vmatpush2.bf16.msra.mxu0 0
        %641 = vmatprep.subr.bf16.mxu0 0
        %642 = vmatpush2.bf16.msra.mxu0 0
        %643 = vmatprep.subr.bf16.mxu0 0
        %644 = vmatpush2.bf16.msra.mxu0 0
        %645 = vmatprep.subr.bf16.mxu0 0
        %646 = vmatpush2.bf16.msra.mxu0 0
        %647 = vmatprep.subr.bf16.mxu0 0
        %648 = vmatpush2.bf16.msra.mxu0 0
        %649 = vmatprep.subr.bf16.mxu0 0
        %650 = vmatpush2.bf16.msra.mxu0 0
        %651 = vmatprep.mubr.bf16.mxu0 0
        %652 = vmatmul.mubr.bf16.gmra.mxu0 %v614
        %v653 = vpop.f32.mrf.mxu0
        %v654 = vadd.f32 %v585, %v653
        %v655 = vpop.f32.mrf.mxu0
        %v656 = vpop.f32.mrf.mxu0
        %v657 = vadd.f32 %v590, %v656
        %v658 = vpop.f32.mrf.mxu0
        %659 = vmatprep.mubr.bf16.mxu0 0
        %660 = vmatmul.mubr.bf16.gmra.mxu0 %v617
        %v661 = vpop.f32.mrf.mxu0
        %v662 = vadd.f32 %v595, %v661
        %v663 = vpop.f32.mrf.mxu0
        %v664 = vpop.f32.mrf.mxu0
        %v665 = vadd.f32 %v600, %v664
        %v666 = vpop.f32.mrf.mxu0
        %667 = vdwg.mxu0
        %vm668 = vcmp.ge.f32.partialorder %v654, 0.0
        %vm669 = vcmp.ge.f32.partialorder %v657, 0.0
        %vm670 = vcmp.ge.f32.partialorder %v662, 0.0
        %vm671 = vcmp.ge.f32.partialorder %v665, 0.0
        %v672 = vmul.f32 %v654, 0.2
        %v673 = vmul.f32 %v657, 0.2
        %v674 = vmul.f32 %v662, 0.2
        %v675 = vmul.f32 %v665, 0.2
        %v676 = vsel %vm668, %v654, %v672
        %v677 = vsel %vm669, %v657, %v673
        %v678 = vsel %vm670, %v662, %v674
        %v679 = vsel %vm671, %v665, %v675
        %v680 = vadd.f32 %v493, %v676
        %v681 = vadd.f32 %v494, %v677
        %v682 = vadd.f32 %v495, %v678
        %v683 = vadd.f32 %v496, %v679
        %v684 = vpack.c.bf16 %v681, %v680
        %v685 = vpack.c.bf16 %v683, %v682
        %v686 = vsel %vm500, %v680, 0.0
        %687 = vadd.xlane.f32.xlu0 %v686
        %v688 = vpop.xlane.xlu0 %687
        %v689 = vsel %vm500, %v681, 0.0
        %690 = vadd.xlane.f32.xlu0 %v689
        %v691 = vpop.xlane.xlu0 %690
        %v692 = vsel %vm500, %v682, 0.0
        %693 = vadd.xlane.f32.xlu0 %v692
        %v694 = vpop.xlane.xlu0 %693
        %v695 = vsel %vm500, %v683, 0.0
        %696 = vadd.xlane.f32.xlu0 %v695
        %v697 = vpop.xlane.xlu0 %696
        %v698 = vrcp.pop 8.0
        %v699 = vmul.f32 %v688, %v698
        %v700 = vmul.f32 %v691, %v698
        %v701 = vmul.f32 %v694, %v698
        %v702 = vmul.f32 %v697, %v698
        %v703 = vld [vmem:[%s4] sm:$0xf]
        %v704 = vld [vmem:[%s4 + $0x4] sm:$0xf]
        %v705 = vld [vmem:[%s4 + $0x8] sm:$0xf]
        %v706 = vld [vmem:[%s4 + $0xc] sm:$0xf]
        %v707 = vpack.c.bf16 %v700, %v699
        %v708 = vpack.c.bf16 %v702, %v701
        %v709 = vld [vmem:[%s5] sm:$0xff]
        %v710 = vld [vmem:[%s5 + $0x8] sm:$0xff]
        %v711 = vld [vmem:[%s5 + $0x10] sm:$0xff]
        %v712 = vld [vmem:[%s5 + $0x18] sm:$0xff]
        %v717 = vunpack.c.l.b16 %v703
        %v718 = vunpack.c.l.b16 %v704
        %v719 = vunpack.c.l.b16 %v705
        %v720 = vunpack.c.l.b16 %v706
        %v721 = vpack.c.b16 %v718, %v717
        %v722 = vpack.c.b16 %v720, %v719
        %v724 = vsel %vm612, %v721, 0
        %v727 = vsel %vm612, %v722, 0
        %729 = vmatprep.subr.bf16.mxu0 0
        %730 = vmatpush1.bf16.msra.mxu0 0
        %731 = vmatprep.subr.bf16.mxu0 0
        %732 = vmatpush1.bf16.msra.mxu0 0
        %733 = vmatprep.subr.bf16.mxu0 0
        %734 = vmatpush1.bf16.msra.mxu0 0
        %735 = vmatprep.subr.bf16.mxu0 0
        %736 = vmatpush1.bf16.msra.mxu0 0
        %737 = vmatprep.subr.bf16.mxu0 0
        %738 = vmatpush1.bf16.msra.mxu0 0
        %739 = vmatprep.subr.bf16.mxu0 0
        %740 = vmatpush1.bf16.msra.mxu0 0
        %741 = vmatprep.subr.bf16.mxu0 0
        %742 = vmatpush1.bf16.msra.mxu0 %v708
        %743 = vmatprep.subr.bf16.mxu0 0
        %744 = vmatpush1.bf16.msra.mxu0 %v707
        %745 = vmatprep.subr.bf16.mxu0 0
        %746 = vmatpush2.bf16.msra.mxu0 0
        %747 = vmatprep.subr.bf16.mxu0 0
        %748 = vmatpush2.bf16.msra.mxu0 0
        %749 = vmatprep.subr.bf16.mxu0 0
        %750 = vmatpush2.bf16.msra.mxu0 0
        %751 = vmatprep.subr.bf16.mxu0 0
        %752 = vmatpush2.bf16.msra.mxu0 0
        %753 = vmatprep.subr.bf16.mxu0 0
        %754 = vmatpush2.bf16.msra.mxu0 0
        %755 = vmatprep.subr.bf16.mxu0 0
        %756 = vmatpush2.bf16.msra.mxu0 0
        %757 = vmatprep.subr.bf16.mxu0 0
        %758 = vmatpush2.bf16.msra.mxu0 0
        %759 = vmatprep.subr.bf16.mxu0 0
        %760 = vmatpush2.bf16.msra.mxu0 0
        %761 = vmatprep.mubr.bf16.mxu0 0
        %762 = vmatmul.mubr.bf16.gmra.mxu0 %v724
        %v763 = vpop.f32.mrf.mxu0
        %v764 = vadd.f32 %v709, %v763
        %v765 = vpop.f32.mrf.mxu0
        %v766 = vpop.f32.mrf.mxu0
        %v767 = vadd.f32 %v710, %v766
        %v768 = vpop.f32.mrf.mxu0
        %769 = vmatprep.mubr.bf16.mxu0 0
        %770 = vmatmul.mubr.bf16.gmra.mxu0 %v727
        %v771 = vpop.f32.mrf.mxu0
        %v772 = vadd.f32 %v711, %v771
        %v773 = vpop.f32.mrf.mxu0
        %v774 = vpop.f32.mrf.mxu0
        %v775 = vadd.f32 %v712, %v774
        %v776 = vpop.f32.mrf.mxu0
        %777 = vdwg.mxu0
        %v778 = vld [vmem:[%s6] sm:$0xff]
        %v779 = vld [vmem:[%s6 + $0x8] sm:$0xff]
        %v780 = vld [vmem:[%s6 + $0x10] sm:$0xff]
        %v781 = vld [vmem:[%s6 + $0x18] sm:$0xff]
        %786 = vrot.lane.b32.xlu0 %v778, 126
        %v787 = vpop.permute.xlu0 %786
        %788 = vrot.lane.b32.xlu0 %v779, 126
        %v789 = vpop.permute.xlu0 %788
        %790 = vrot.lane.b32.xlu0 %v780, 126
        %v791 = vpop.permute.xlu0 %790
        %792 = vrot.lane.b32.xlu0 %v781, 126
        %v793 = vpop.permute.xlu0 %792
        %v798 = vsub.f32 %v764, %v787
        %v799 = vsub.f32 %v767, %v789
        %v800 = vsub.f32 %v772, %v791
        %v801 = vsub.f32 %v775, %v793
        %v802 = vadd.f32 %v778, 1e-05
        %v803 = vadd.f32 %v779, 1e-05
        %v804 = vadd.f32 %v780, 1e-05
        %v805 = vadd.f32 %v781, 1e-05
        %v806 = vrsqrt.pop %v802
        %v807 = vrsqrt.pop %v803
        %v808 = vrsqrt.pop %v804
        %v809 = vrsqrt.pop %v805
        %814 = vrot.lane.b32.xlu0 %v806, 125
        %v815 = vpop.permute.xlu0 %814
        %816 = vrot.lane.b32.xlu0 %v807, 125
        %v817 = vpop.permute.xlu0 %816
        %818 = vrot.lane.b32.xlu0 %v808, 125
        %v819 = vpop.permute.xlu0 %818
        %820 = vrot.lane.b32.xlu0 %v809, 125
        %v821 = vpop.permute.xlu0 %820
        %v826 = vmul.f32 %v798, %v815
        %v827 = vmul.f32 %v799, %v817
        %v828 = vmul.f32 %v800, %v819
        %v829 = vmul.f32 %v801, %v821
        %v830 = vmul.f32 %v826, %v778
        %v831 = vmul.f32 %v827, %v779
        %v832 = vmul.f32 %v828, %v780
        %v833 = vmul.f32 %v829, %v781
        %834 = vrot.lane.b32.xlu0 %v778, 127
        %v835 = vpop.permute.xlu0 %834
        %836 = vrot.lane.b32.xlu0 %v779, 127
        %v837 = vpop.permute.xlu0 %836
        %838 = vrot.lane.b32.xlu0 %v780, 127
        %v839 = vpop.permute.xlu0 %838
        %840 = vrot.lane.b32.xlu0 %v781, 127
        %v841 = vpop.permute.xlu0 %840
        %v846 = vadd.f32 %v830, %v835
        %v847 = vadd.f32 %v831, %v837
        %v848 = vadd.f32 %v832, %v839
        %v849 = vadd.f32 %v833, %v841
        %vm850 = vcmp.ge.f32.partialorder %v846, 0.0
        %vm851 = vcmp.ge.f32.partialorder %v847, 0.0
        %vm852 = vcmp.ge.f32.partialorder %v848, 0.0
        %vm853 = vcmp.ge.f32.partialorder %v849, 0.0
        %v854 = vmul.f32 %v846, 0.2
        %v855 = vmul.f32 %v847, 0.2
        %v856 = vmul.f32 %v848, 0.2
        %v857 = vmul.f32 %v849, 0.2
        %v858 = vsel %vm850, %v846, %v854
        %v859 = vsel %vm851, %v847, %v855
        %v860 = vsel %vm852, %v848, %v856
        %v861 = vsel %vm853, %v849, %v857
        %v862 = vld [vmem:[%s7] sm:$0xf]
        %v863 = vpack.c.bf16 %v859, %v858
        %v864 = vpack.c.bf16 %v861, %v860
        %v866 = vsel %vm612, %v862, 0
        %868 = vmatprep.subr.bf16.mxu0 0
        %869 = vmatpush1.bf16.msra.mxu0 0
        %870 = vmatprep.subr.bf16.mxu0 0
        %871 = vmatpush1.bf16.msra.mxu0 0
        %872 = vmatprep.subr.bf16.mxu0 0
        %873 = vmatpush1.bf16.msra.mxu0 0
        %874 = vmatprep.subr.bf16.mxu0 0
        %875 = vmatpush1.bf16.msra.mxu0 0
        %876 = vmatprep.subr.bf16.mxu0 0
        %877 = vmatpush1.bf16.msra.mxu0 0
        %878 = vmatprep.subr.bf16.mxu0 0
        %879 = vmatpush1.bf16.msra.mxu0 0
        %880 = vmatprep.subr.bf16.mxu0 0
        %881 = vmatpush1.bf16.msra.mxu0 %v864
        %882 = vmatprep.subr.bf16.mxu0 0
        %883 = vmatpush1.bf16.msra.mxu0 %v863
        %884 = vmatprep.subr.bf16.mxu0 0
        %885 = vmatpush2.bf16.msra.mxu0 0
        %886 = vmatprep.subr.bf16.mxu0 0
        %887 = vmatpush2.bf16.msra.mxu0 0
        %888 = vmatprep.subr.bf16.mxu0 0
        %889 = vmatpush2.bf16.msra.mxu0 0
        %890 = vmatprep.subr.bf16.mxu0 0
        %891 = vmatpush2.bf16.msra.mxu0 0
        %892 = vmatprep.subr.bf16.mxu0 0
        %893 = vmatpush2.bf16.msra.mxu0 0
        %894 = vmatprep.subr.bf16.mxu0 0
        %895 = vmatpush2.bf16.msra.mxu0 0
        %896 = vmatprep.subr.bf16.mxu0 0
        %897 = vmatpush2.bf16.msra.mxu0 0
        %898 = vmatprep.subr.bf16.mxu0 0
        %899 = vmatpush2.bf16.msra.mxu0 0
        %900 = vmatprep.mubr.bf16.mxu0 0
        %901 = vmatmul.mubr.bf16.gmra.mxu0 %v866
        %v902 = vpop.f32.mrf.mxu0
        %v903 = vadd.f32 0.0, %v902
        %v904 = vpop.f32.mrf.mxu0
        %v905 = vpop.f32.mrf.mxu0
        %v906 = vpop.f32.mrf.mxu0
        %907 = vdwg.mxu0
        %v908 = vld [vmem:[%s8] sm:$0xf]
        %v910 = vsel %vm612, %v908, 0
        %912 = vmatprep.subr.bf16.mxu0 0
        %913 = vmatpush1.bf16.msra.mxu0 0
        %914 = vmatprep.subr.bf16.mxu0 0
        %915 = vmatpush1.bf16.msra.mxu0 0
        %916 = vmatprep.subr.bf16.mxu0 0
        %917 = vmatpush1.bf16.msra.mxu0 0
        %918 = vmatprep.subr.bf16.mxu0 0
        %919 = vmatpush1.bf16.msra.mxu0 0
        %920 = vmatprep.subr.bf16.mxu0 0
        %921 = vmatpush1.bf16.msra.mxu0 0
        %922 = vmatprep.subr.bf16.mxu0 0
        %923 = vmatpush1.bf16.msra.mxu0 0
        %924 = vmatprep.subr.bf16.mxu0 0
        %925 = vmatpush1.bf16.msra.mxu0 %v685
        %926 = vmatprep.subr.bf16.mxu0 0
        %927 = vmatpush1.bf16.msra.mxu0 %v684
        %928 = vmatprep.subr.bf16.mxu0 0
        %929 = vmatpush2.bf16.msra.mxu0 0
        %930 = vmatprep.subr.bf16.mxu0 0
        %931 = vmatpush2.bf16.msra.mxu0 0
        %932 = vmatprep.subr.bf16.mxu0 0
        %933 = vmatpush2.bf16.msra.mxu0 0
        %934 = vmatprep.subr.bf16.mxu0 0
        %935 = vmatpush2.bf16.msra.mxu0 0
        %936 = vmatprep.subr.bf16.mxu0 0
        %937 = vmatpush2.bf16.msra.mxu0 0
        %938 = vmatprep.subr.bf16.mxu0 0
        %939 = vmatpush2.bf16.msra.mxu0 0
        %940 = vmatprep.subr.bf16.mxu0 0
        %941 = vmatpush2.bf16.msra.mxu0 0
        %942 = vmatprep.subr.bf16.mxu0 0
        %943 = vmatpush2.bf16.msra.mxu0 0
        %944 = vmatprep.mubr.bf16.mxu0 0
        %945 = vmatmul.mubr.bf16.gmra.mxu0 %v910
        %v946 = vpop.f32.mrf.mxu0
        %v947 = vadd.f32 0.0, %v946
        %v948 = vpop.f32.mrf.mxu0
        %v949 = vpop.f32.mrf.mxu0
        %v950 = vpop.f32.mrf.mxu0
        %951 = vdwg.mxu0
        %953 = vset.pattern.permute.xlu0 0
        %954 = vperm.xlu0 %953, %v903
        %v955 = vpop.permute.xlu0 %954
        %v957 = vadd.f32 %v955, %v947
        %v958 = vld [vmem:[%s9] sm:$0xff]
        %960 = vset.pattern.permute.xlu0 0
        %961 = vperm.xlu0 %960, %v958
        %v962 = vpop.permute.xlu0 %961
        %v964 = vadd.f32 %v957, %v962
        %v965 = vxor.u32 %v964, 2147483648
        %v966 = vmul.f32 %v965, 1.442695
        %v967 = vpow.pop %v966
        %v968 = vadd.f32 %v967, 1.0
        %v969 = vrcp.pop %v968
        %v970 = vmul.f32 1.0, %v969
        %v971 = vpack.c.bf16 %v970, %v970
        %v973 = vsel %vm500, %v684, 0
        %v976 = vsel %vm500, %v685, 0
        %v979 = vsel %vm507, %v971, 0
        %981 = vmatprep.subr.bf16.mxu0 0
        %982 = vmatpush1.bf16.msra.mxu0 0
        %983 = vmatprep.subr.bf16.mxu0 0
        %984 = vmatpush1.bf16.msra.mxu0 0
        %985 = vmatprep.subr.bf16.mxu0 0
        %986 = vmatpush1.bf16.msra.mxu0 0
        %987 = vmatprep.subr.bf16.mxu0 0
        %988 = vmatpush1.bf16.msra.mxu0 0
        %989 = vmatprep.subr.bf16.mxu0 0
        %990 = vmatpush1.bf16.msra.mxu0 0
        %991 = vmatprep.subr.bf16.mxu0 0
        %992 = vmatpush1.bf16.msra.mxu0 0
        %993 = vmatprep.subr.bf16.mxu0 0
        %994 = vmatpush1.bf16.msra.mxu0 0
        %995 = vmatprep.subr.bf16.mxu0 0
        %996 = vmatpush1.bf16.msra.mxu0 %v979
        %997 = vmatprep.subr.bf16.mxu0 0
        %998 = vmatpush2.bf16.msra.mxu0 0
        %999 = vmatprep.subr.bf16.mxu0 0
        %1000 = vmatpush2.bf16.msra.mxu0 0
        %1001 = vmatprep.subr.bf16.mxu0 0
        %1002 = vmatpush2.bf16.msra.mxu0 0
        %1003 = vmatprep.subr.bf16.mxu0 0
        %1004 = vmatpush2.bf16.msra.mxu0 0
        %1005 = vmatprep.subr.bf16.mxu0 0
        %1006 = vmatpush2.bf16.msra.mxu0 0
        %1007 = vmatprep.subr.bf16.mxu0 0
        %1008 = vmatpush2.bf16.msra.mxu0 0
        %1009 = vmatprep.subr.bf16.mxu0 0
        %1010 = vmatpush2.bf16.msra.mxu0 0
        %1011 = vmatprep.subr.bf16.mxu0 0
        %1012 = vmatpush2.bf16.msra.mxu0 0
        %1013 = vmatprep.mubr.bf16.mxu0 0
        %1014 = vmatmul.mubr.bf16.gmra.mxu0 %v973
        %v1015 = vpop.f32.mrf.mxu0
        %v1016 = vadd.f32 0.0, %v1015
        %v1017 = vpop.f32.mrf.mxu0
        %v1018 = vpop.f32.mrf.mxu0
        %v1019 = vadd.f32 0.0, %v1018
        %v1020 = vpop.f32.mrf.mxu0
        %1021 = vmatprep.mubr.bf16.mxu0 0
        %1022 = vmatmul.mubr.bf16.gmra.mxu0 %v976
        %v1023 = vpop.f32.mrf.mxu0
        %v1024 = vadd.f32 0.0, %v1023
        %v1025 = vpop.f32.mrf.mxu0
        %v1026 = vpop.f32.mrf.mxu0
        %v1027 = vadd.f32 0.0, %v1026
        %v1028 = vpop.f32.mrf.mxu0
        %1029 = vdwg.mxu0
        %vm1030 = vcmp.ge.f32.partialorder %v1016, 0.0
        %vm1031 = vcmp.ge.f32.partialorder %v1019, 0.0
        %vm1032 = vcmp.ge.f32.partialorder %v1024, 0.0
        %vm1033 = vcmp.ge.f32.partialorder %v1027, 0.0
        %v1034 = vmul.f32 %v1016, 0.2
        %v1035 = vmul.f32 %v1019, 0.2
        %v1036 = vmul.f32 %v1024, 0.2
        %v1037 = vmul.f32 %v1027, 0.2
        %v1038 = vsel %vm1030, %v1016, %v1034
        %v1039 = vsel %vm1031, %v1019, %v1035
        %v1040 = vsel %vm1032, %v1024, %v1036
        %v1041 = vsel %vm1033, %v1027, %v1037
        %v1042 = vld [vmem:[%s10] sm:$0xf]
        %v1043 = vld [vmem:[%s10 + $0x4] sm:$0xf]
        %v1044 = vld [vmem:[%s10 + $0x8] sm:$0xf]
        %v1045 = vld [vmem:[%s10 + $0xc] sm:$0xf]
        %v1046 = vpack.c.bf16 %v1039, %v1038
        %v1047 = vpack.c.bf16 %v1041, %v1040
        %v1048 = vld [vmem:[%s11] sm:$0xff]
        %v1049 = vld [vmem:[%s11 + $0x8] sm:$0xff]
        %v1050 = vld [vmem:[%s11 + $0x10] sm:$0xff]
        %v1051 = vld [vmem:[%s11 + $0x18] sm:$0xff]
        %1053 = vset.pattern.permute.xlu0 0
        %1054 = vperm.xlu0 %1053, %v1048
        %v1055 = vpop.permute.xlu0 %1054
        %1058 = vset.pattern.permute.xlu0 0
        %1059 = vperm.xlu0 %1058, %v1049
        %v1060 = vpop.permute.xlu0 %1059
        %1063 = vset.pattern.permute.xlu0 0
        %1064 = vperm.xlu0 %1063, %v1050
        %v1065 = vpop.permute.xlu0 %1064
        %1068 = vset.pattern.permute.xlu0 0
        %1069 = vperm.xlu0 %1068, %v1051
        %v1070 = vpop.permute.xlu0 %1069
        %v1076 = vunpack.c.l.b16 %v1042
        %v1077 = vunpack.c.l.b16 %v1043
        %v1078 = vunpack.c.l.b16 %v1044
        %v1079 = vunpack.c.l.b16 %v1045
        %v1080 = vpack.c.b16 %v1077, %v1076
        %v1081 = vpack.c.b16 %v1079, %v1078
        %v1083 = vsel %vm612, %v1080, 0
        %v1086 = vsel %vm612, %v1081, 0
        %1088 = vmatprep.subr.bf16.mxu0 0
        %1089 = vmatpush1.bf16.msra.mxu0 0
        %1090 = vmatprep.subr.bf16.mxu0 0
        %1091 = vmatpush1.bf16.msra.mxu0 0
        %1092 = vmatprep.subr.bf16.mxu0 0
        %1093 = vmatpush1.bf16.msra.mxu0 0
        %1094 = vmatprep.subr.bf16.mxu0 0
        %1095 = vmatpush1.bf16.msra.mxu0 0
        %1096 = vmatprep.subr.bf16.mxu0 0
        %1097 = vmatpush1.bf16.msra.mxu0 0
        %1098 = vmatprep.subr.bf16.mxu0 0
        %1099 = vmatpush1.bf16.msra.mxu0 0
        %1100 = vmatprep.subr.bf16.mxu0 0
        %1101 = vmatpush1.bf16.msra.mxu0 %v1047
        %1102 = vmatprep.subr.bf16.mxu0 0
        %1103 = vmatpush1.bf16.msra.mxu0 %v1046
        %1104 = vmatprep.subr.bf16.mxu0 0
        %1105 = vmatpush2.bf16.msra.mxu0 0
        %1106 = vmatprep.subr.bf16.mxu0 0
        %1107 = vmatpush2.bf16.msra.mxu0 0
        %1108 = vmatprep.subr.bf16.mxu0 0
        %1109 = vmatpush2.bf16.msra.mxu0 0
        %1110 = vmatprep.subr.bf16.mxu0 0
        %1111 = vmatpush2.bf16.msra.mxu0 0
        %1112 = vmatprep.subr.bf16.mxu0 0
        %1113 = vmatpush2.bf16.msra.mxu0 0
        %1114 = vmatprep.subr.bf16.mxu0 0
        %1115 = vmatpush2.bf16.msra.mxu0 0
        %1116 = vmatprep.subr.bf16.mxu0 0
        %1117 = vmatpush2.bf16.msra.mxu0 0
        %1118 = vmatprep.subr.bf16.mxu0 0
        %1119 = vmatpush2.bf16.msra.mxu0 0
        %1120 = vmatprep.mubr.bf16.mxu0 0
        %1121 = vmatmul.mubr.bf16.gmra.mxu0 %v1083
        %v1122 = vpop.f32.mrf.mxu0
        %v1123 = vadd.f32 %v1055, %v1122
        %v1124 = vpop.f32.mrf.mxu0
        %v1125 = vpop.f32.mrf.mxu0
        %v1126 = vadd.f32 %v1060, %v1125
        %v1127 = vpop.f32.mrf.mxu0
        %1128 = vmatprep.mubr.bf16.mxu0 0
        %1129 = vmatmul.mubr.bf16.gmra.mxu0 %v1086
        %v1130 = vpop.f32.mrf.mxu0
        %v1131 = vadd.f32 %v1065, %v1130
        %v1132 = vpop.f32.mrf.mxu0
        %v1133 = vpop.f32.mrf.mxu0
        %v1134 = vadd.f32 %v1070, %v1133
        %v1135 = vpop.f32.mrf.mxu0
        %1136 = vdwg.mxu0
        %vm1137 = vcmp.ge.f32.partialorder %v1123, 0.0
        %vm1138 = vcmp.ge.f32.partialorder %v1126, 0.0
        %vm1139 = vcmp.ge.f32.partialorder %v1131, 0.0
        %vm1140 = vcmp.ge.f32.partialorder %v1134, 0.0
        %v1141 = vmul.f32 %v1123, 0.2
        %v1142 = vmul.f32 %v1126, 0.2
        %v1143 = vmul.f32 %v1131, 0.2
        %v1144 = vmul.f32 %v1134, 0.2
        %v1145 = vsel %vm1137, %v1123, %v1141
        %v1146 = vsel %vm1138, %v1126, %v1142
        %v1147 = vsel %vm1139, %v1131, %v1143
        %v1148 = vsel %vm1140, %v1134, %v1144
        %v1149 = vadd.f32 %v493, %v1145
        %v1150 = vadd.f32 %v494, %v1146
        %v1151 = vadd.f32 %v495, %v1147
        %v1152 = vadd.f32 %v496, %v1148
        %v1153 = vld [vmem:[%s12] sm:$0xff]
        %v1155 = vsel %vm500, %v1149, 0
        %v1158 = vsel %vm500, %v1150, 0
        %v1161 = vsel %vm500, %v1151, 0
        %v1164 = vsel %vm500, %v1152, 0
        %1166 = vmatprep.subr.mxu0 0.0
        %1167 = vmatpush1.msra.mxu0 0.0
        %1168 = vmatprep.subr.mxu0 0.0
        %1169 = vmatpush1.msra.mxu0 0.0
        %1170 = vmatprep.subr.mxu0 0.0
        %1171 = vmatpush1.msra.mxu0 0.0
        %1172 = vmatprep.subr.mxu0 0.0
        %1173 = vmatpush1.msra.mxu0 0.0
        %1174 = vmatprep.subr.mxu0 0.0
        %1175 = vmatpush1.msra.mxu0 0.0
        %1176 = vmatprep.subr.mxu0 0.0
        %1177 = vmatpush1.msra.mxu0 0.0
        %1178 = vmatprep.subr.mxu0 0.0
        %1179 = vmatpush1.msra.mxu0 0.0
        %1180 = vmatprep.subr.mxu0 0.0
        %1181 = vmatpush1.msra.mxu0 0.0
        %1182 = vmatprep.subr.mxu0 0.0
        %1183 = vmatpush1.msra.mxu0 0.0
        %1184 = vmatprep.subr.mxu0 0.0
        %1185 = vmatpush1.msra.mxu0 0.0
        %1186 = vmatprep.subr.mxu0 0.0
        %1187 = vmatpush1.msra.mxu0 0.0
        %1188 = vmatprep.subr.mxu0 0.0
        %1189 = vmatpush1.msra.mxu0 0.0
        %1190 = vmatprep.subr.mxu0 0.0
        %1191 = vmatpush1.msra.mxu0 0.0
        %1192 = vmatprep.subr.mxu0 0.0
        %1193 = vmatpush1.msra.mxu0 0.0
        %1194 = vmatprep.subr.mxu0 0.0
        %1195 = vmatpush1.msra.mxu0 0.0
        %1196 = vmatprep.subr.mxu0 0.0
        %1197 = vmatpush1.msra.mxu0 %v1153
        %1198 = vmatprep.subr.mxu0 0.0
        %1199 = vmatpush2.msra.mxu0 0.0
        %1200 = vmatprep.subr.mxu0 0.0
        %1201 = vmatpush2.msra.mxu0 0.0
        %1202 = vmatprep.subr.mxu0 0.0
        %1203 = vmatpush2.msra.mxu0 0.0
        %1204 = vmatprep.subr.mxu0 0.0
        %1205 = vmatpush2.msra.mxu0 0.0
        %1206 = vmatprep.subr.mxu0 0.0
        %1207 = vmatpush2.msra.mxu0 0.0
        %1208 = vmatprep.subr.mxu0 0.0
        %1209 = vmatpush2.msra.mxu0 0.0
        %1210 = vmatprep.subr.mxu0 0.0
        %1211 = vmatpush2.msra.mxu0 0.0
        %1212 = vmatprep.subr.mxu0 0.0
        %1213 = vmatpush2.msra.mxu0 0.0
        %1214 = vmatprep.subr.mxu0 0.0
        %1215 = vmatpush2.msra.mxu0 0.0
        %1216 = vmatprep.subr.mxu0 0.0
        %1217 = vmatpush2.msra.mxu0 0.0
        %1218 = vmatprep.subr.mxu0 0.0
        %1219 = vmatpush2.msra.mxu0 0.0
        %1220 = vmatprep.subr.mxu0 0.0
        %1221 = vmatpush2.msra.mxu0 0.0
        %1222 = vmatprep.subr.mxu0 0.0
        %1223 = vmatpush2.msra.mxu0 0.0
        %1224 = vmatprep.subr.mxu0 0.0
        %1225 = vmatpush2.msra.mxu0 0.0
        %1226 = vmatprep.subr.mxu0 0.0
        %1227 = vmatpush2.msra.mxu0 0.0
        %1228 = vmatprep.subr.mxu0 0.0
        %1229 = vmatpush2.msra.mxu0 0.0
        %1230 = vmatprep.mubr.f32.mxu0 0.0
        %1231 = vmatmul.mubr.f32.gmra.mxu0 %v1155
        %v1232 = vpop.f32.mrf.mxu0
        %v1233 = vadd.f32 0.0, %v1232
        %v1234 = vpop.f32.mrf.mxu0
        %1235 = vmatprep.mubr.f32.mxu0 0.0
        %1236 = vmatmul.mubr.f32.gmra.mxu0 %v1158
        %v1237 = vpop.f32.mrf.mxu0
        %v1238 = vadd.f32 0.0, %v1237
        %v1239 = vpop.f32.mrf.mxu0
        %1240 = vmatprep.mubr.f32.mxu0 0.0
        %1241 = vmatmul.mubr.f32.gmra.mxu0 %v1161
        %v1242 = vpop.f32.mrf.mxu0
        %v1243 = vadd.f32 0.0, %v1242
        %v1244 = vpop.f32.mrf.mxu0
        %1245 = vmatprep.mubr.f32.mxu0 0.0
        %1246 = vmatmul.mubr.f32.gmra.mxu0 %v1164
        %v1247 = vpop.f32.mrf.mxu0
        %v1248 = vadd.f32 0.0, %v1247
        %v1249 = vpop.f32.mrf.mxu0
        %1250 = vdwg.mxu0
        %v1251 = vld [vmem:[%s13] sm:$0xff]
        %v1252 = vld [vmem:[%s13 + $0x8] sm:$0xff]
        %v1253 = vld [vmem:[%s13 + $0x10] sm:$0xff]
        %v1254 = vld [vmem:[%s13 + $0x18] sm:$0xff]
        %v1255 = vmul.f32 %v1251, %v1233
        %v1256 = vmul.f32 %v1252, %v1238
        %v1257 = vmul.f32 %v1253, %v1243
        %v1258 = vmul.f32 %v1254, %v1248
        %v1259 = vsel %vm500, %v1255, 0.0
        %v1260 = vsel %vm500, %v1256, 0.0
        %v1261 = vadd.f32 %v1259, %v1260
        %v1262 = vsel %vm500, %v1257, 0.0
        %v1263 = vadd.f32 %v1261, %v1262
        %v1264 = vsel %vm500, %v1258, 0.0
        %v1265 = vadd.f32 %v1263, %v1264
        %v1266 = vrot.slane %v1265, 4
        %v1267 = vadd.f32 %v1265, %v1266
        %v1268 = vrot.slane %v1267, 2
        %v1269 = vadd.f32 %v1267, %v1268
        %v1270 = vrot.slane %v1269, 1
        %v1271 = vadd.f32 %v1269, %v1270
        %v1272 = vld [vmem:[%s14] sm:$0x1]
        %v1273 = vadd.f32 %v1271, %v1272
        %vm1274 = vcmask 57344
        %1275 = vst.msk [vmem:[%s486] sm:$0x1] %vm1274, %v1273
        %s1276 = sand.u32 %s357, 1
        %s1277 = scalar_lea.sflag [#allocation3], %s1276
        %s1278 = sand.u32 %s357, 1
        %s1279 = scalar_lea.vmem [#allocation2], %s1278
        // Predicated region
        $region81: #{forward.3} parent=79 // pred_check
          %p1280 = pneg %p367
        $region82: #{forward.3} parent=79 // pred_check_branch
          %1282 = sbr.rel (%p1280) target = $region84
        $region83: #{forward.3} parent=79 // pred_region
          %s1284 = ssub.s32 16, 16
          %1285 = vsyncadd %s1277, %s1284
          %s1286 = smul.addr %s29, 16
          %s1287 = scalar_lea.hbm %s15, %s1286
          %s1289 = sshll.u32 %s1279, 4
          %s1290 = int_to_ptr.vmem [resolvable:$true] %s1289
          %1292 = dma.vmem_to_hbm [thread:$0]  %s1290, 16, %s1287, %s1277
        $region84: #{forward.3} parent=79 // pred_fallthru
          _
      $region80: #{forward.3} parent=5 // pred_fallthru
        _
      %p1293 = scmp.le.s32.totalorder 2, %s24
      // Predicated region
      $region85: #{forward.3} parent=5 // pred_check
        %p1294 = pneg %p1293
      $region86: #{forward.3} parent=5 // pred_check_branch
        %1296 = sbr.rel (%p1294) target = $region88
      $region87: #{forward.3} parent=5 // pred_region
        %s1297 = ssub.s32 %s24, 2
        // Predicated region
        $region89: #{forward.3} parent=87 // pred_check
          %p1298 = pneg %p373
        $region90: #{forward.3} parent=87 // pred_check_branch
          %1300 = sbr.rel (%p1298) target = $region92
        $region91: #{forward.3} parent=87 // pred_region
          %s1301 = sand.u32 %s358, 1
          %s1302 = scalar_lea.sflag [#allocation3], %s1301
          %s1303 = sand.u32 %s358, 1
          %s1304 = scalar_lea.vmem [#allocation2], %s1303
          %1305 = dma.done %s1302, 16
        $region92: #{forward.3} parent=87 // pred_fallthru
          _
      $region88: #{forward.3} parent=5 // pred_fallthru
        _
    $region6: #{forward.3} parent=1 // loop_footer
      %s28 = sadd.s32 1, %s24
    $region7: #{forward.3} parent=1 // loop_footer_branch
      %23 = sbr.rel target = $region3
    $region8: #{forward.3} parent=1 // loop_exit
      _
    %1306 = vsyncpa [#allocation3], 1
    %s1307 = scalar_lea.sflag [#allocation3], 1
    %1308 = vsyncpa %s1307, 1

</llo_original>
